<compile_context>
chip_gen: v6e
topology: v6e:2x2x1
jax: 0.10.0
libtpu: 0.0.40
codegen_flags: <defaults>
</compile_context>

<pallas_src>
import functools
import math

import jax
import jax.numpy as jnp
import numpy as np
from jax.experimental import pallas as pl
from jax.experimental.pallas import tpu as pltpu

LN_EPS = 1e-5


def _layernorm(x, gamma, beta):
    # The LayerNorm subclass in the reference always computes in float32.
    xf = x.astype(jnp.float32)
    mu = jnp.mean(xf, axis=-1, keepdims=True)
    var = jnp.mean((xf - mu) ** 2, axis=-1, keepdims=True)
    xn = (xf - mu) * jax.lax.rsqrt(var + LN_EPS)
    return xn * gamma + beta


def _resblock_kernel(*refs, n_head, has_mask, compute_dtype):
    if has_mask:
        (x_ref, mask_ref,
         ln1_g_ref, ln1_b_ref, w_in_ref, b_in_ref, w_out_ref, b_out_ref,
         ln2_g_ref, ln2_b_ref, w_fc_ref, b_fc_ref, w_proj_ref, b_proj_ref,
         o_ref, attn_sc) = refs
    else:
        (x_ref,
         ln1_g_ref, ln1_b_ref, w_in_ref, b_in_ref, w_out_ref, b_out_ref,
         ln2_g_ref, ln2_b_ref, w_fc_ref, b_fc_ref, w_proj_ref, b_proj_ref,
         o_ref, attn_sc) = refs
        mask_ref = None

    x = x_ref[0].astype(jnp.float32)            # (L, D) for this batch element
    L, D = x.shape
    hd = D // n_head
    cdt = compute_dtype

    def mm(a, w_ref):
        # Weights are already pre-transposed / pre-scaled / cast on the host.
        return jnp.dot(a.astype(cdt), w_ref[...], preferred_element_type=jnp.float32)

    # ---------------- attention branch ----------------
    xn = _layernorm(x, ln1_g_ref[...], ln1_b_ref[...])
    qkv = mm(xn, w_in_ref) + b_in_ref[...]       # (L, 3D), f32; Q rows already scaled
    q = qkv[:, :D].astype(cdt)
    k = qkv[:, D:2 * D].astype(cdt)
    v = qkv[:, 2 * D:].astype(cdt)

    mask = mask_ref[...].astype(jnp.float32) if has_mask else None

    for h in range(n_head):                      # static loop: pure 2-D MXU matmuls per head
        sl = slice(h * hd, (h + 1) * hd)
        qh, kh, vh = q[:, sl], k[:, sl], v[:, sl]
        # QK^T without materializing an explicit transpose.
        s = jax.lax.dot_general(qh, kh, (((1,), (1,)), ((), ())),
                                preferred_element_type=jnp.float32)   # (L, L)
        if has_mask:
            s = s + mask
        m = jnp.max(s, axis=-1, keepdims=True)
        p = jnp.exp(s - m)
        l = jnp.sum(p, axis=-1, keepdims=True)
        oh = jnp.dot(p.astype(cdt), vh, preferred_element_type=jnp.float32)  # (L, hd)
        # Deferred softmax normalization: L*hd multiplies instead of L*L divides.
        attn_sc[:, sl] = oh * pl.reciprocal(l, approx=False)

    attn = mm(attn_sc[...], w_out_ref) + b_out_ref[...]
    x = x + attn

    # ---------------- MLP branch ----------------
    xn2 = _layernorm(x, ln2_g_ref[...], ln2_b_ref[...])
    h_mid = mm(xn2, w_fc_ref) + b_fc_ref[...]
    h_mid = h_mid * jax.nn.sigmoid(1.702 * h_mid)            # QuickGELU
    y = mm(h_mid, w_proj_ref) + b_proj_ref[...]

    o_ref[0] = (x + y).astype(o_ref.dtype)


def _round_up(x, m):
    return (x + m - 1) // m * m


def residual_attention_block(x_lnd, params, n_head, attn_mask=None,
                             compute_dtype=jnp.float32, l_pad_multiple=8):
    """x_lnd: (L, N, D) in PyTorch's (seq, batch, d_model) convention."""
    L, N, D = x_lnd.shape
    assert D % n_head == 0
    hd = D // n_head

    (ln1_g, ln1_b, w_in, b_in, w_out, b_out,
     ln2_g, ln2_b, w_fc, b_fc, w_proj, b_proj) = params

    # ---- one-time host-side parameter prep (free layout plumbing) ----
    scale = 1.0 / math.sqrt(hd)
    w_in_s = w_in.astype(jnp.float32).at[:D, :].multiply(scale)     # fold q-scale into W_q
    b_in_s = b_in.astype(jnp.float32).at[:, :D].multiply(scale)     # ... and into b_q
    w_in_t = jnp.transpose(w_in_s).astype(compute_dtype)            # (D, 3D)
    w_out_t = jnp.transpose(w_out).astype(compute_dtype)            # (D, D)
    w_fc_t = jnp.transpose(w_fc).astype(compute_dtype)              # (D, 4D)
    w_proj_t = jnp.transpose(w_proj).astype(compute_dtype)          # (4D, D)

    weight_args = [
        ln1_g.astype(jnp.float32), ln1_b.astype(jnp.float32),
        w_in_t, b_in_s,
        w_out_t, b_out.astype(jnp.float32),
        ln2_g.astype(jnp.float32), ln2_b.astype(jnp.float32),
        w_fc_t, b_fc.astype(jnp.float32),
        w_proj_t, b_proj.astype(jnp.float32),
    ]

    # ---- pad L to a sublane-friendly size (use 128 for production CLIP sizes) ----
    Lp = _round_up(L, l_pad_multiple)
    x = jnp.transpose(x_lnd, (1, 0, 2))                              # (N, L, D)
    if Lp != L:
        x = jnp.pad(x, ((0, 0), (0, Lp - L), (0, 0)))

    has_mask = (attn_mask is not None) or (Lp != L)
    inputs = [x]
    in_specs = [pl.BlockSpec((1, Lp, D), lambda b: (b, 0, 0))]       # pipelined per-batch
    if has_mask:
        mask = jnp.zeros((Lp, Lp), jnp.float32)
        if attn_mask is not None:
            mask = mask.at[:L, :L].set(attn_mask.astype(jnp.float32))
        if Lp != L:
            mask = mask.at[:, L:].set(-1e9)                          # mask padded keys
        inputs.append(mask)
        in_specs.append(pl.BlockSpec(memory_space=pltpu.MemorySpace.VMEM))

    # Weights/biases: whole-array resident in VMEM, single copy, no double-buffering.
    in_specs += [pl.BlockSpec(memory_space=pltpu.MemorySpace.VMEM) for _ in weight_args]

    # ---- cost estimate & VMEM budget ----
    itemsize = jnp.dtype(compute_dtype).itemsize
    wbytes = 12 * D * D * itemsize                                   # in/out/fc/proj weights
    flops = int(N * (24 * L * D * D + 4 * L * Lp * D))
    trans = int(N * (n_head * Lp * Lp + 4 * L * D))
    bytes_accessed = int(wbytes + 2 * N * Lp * D * 4)
    cost = pl.CostEstimate(flops=flops, transcendentals=trans,
                           bytes_accessed=bytes_accessed)

    act_bytes = 8 * Lp * 4 * D * 4                                   # activation working set margin
    io_bytes = 4 * Lp * D * 4                                        # double-buffered x / out blocks
    mask_bytes = Lp * Lp * 4 if has_mask else 0
    est = wbytes + act_bytes + io_bytes + mask_bytes + Lp * D * 4
    vmem_limit = int(min(max(2 * est, 32 * 1024 * 1024), 64 * 1024 * 1024))

    # TODO(synk): for v7x single-image inference (N == 1) add a second parallel grid
    # axis (L-tiles or head groups) so both TensorCores have work.
    compiler_params = pltpu.CompilerParams(
        dimension_semantics=("parallel",),
        vmem_limit_bytes=vmem_limit,
    )

    grid_spec = pltpu.PrefetchScalarGridSpec(
        num_scalar_prefetch=0,
        grid=(N,),
        in_specs=in_specs,
        out_specs=pl.BlockSpec((1, Lp, D), lambda b: (b, 0, 0)),
        scratch_shapes=[pltpu.VMEM((Lp, D), jnp.float32)],           # per-head output slab
    )

    kernel = functools.partial(_resblock_kernel, n_head=n_head,
                               has_mask=has_mask, compute_dtype=compute_dtype)

    out = pl.pallas_call(
        kernel,
        out_shape=jax.ShapeDtypeStruct((N, Lp, D), x_lnd.dtype),
        grid_spec=grid_spec,
        compiler_params=compiler_params,
        cost_estimate=cost,
    )(*inputs, *weight_args)

    out = out[:, :L, :]                                              # drop padded rows
    return jnp.transpose(out, (1, 0, 2))                             # back to (L, N, D)


# ------------------------- pure-JAX reference (silent check) -------------------------
def _reference(x_lnd, params, n_head, attn_mask=None):
    (ln1_g, ln1_b, w_in, b_in, w_out, b_out,
     ln2_g, ln2_b, w_fc, b_fc, w_proj, b_proj) = params
    L, N, D = x_lnd.shape
    hd = D // n_head
    mask = jnp.zeros((L, L), jnp.float32) if attn_mask is None else attn_mask

    def ln(x, g, b):
        mu = jnp.mean(x, -1, keepdims=True)
        var = jnp.mean((x - mu) ** 2, -1, keepdims=True)
        return (x - mu) / jnp.sqrt(var + LN_EPS) * g + b

    x = x_lnd
    xn = ln(x, ln1_g[0], ln1_b[0])                                    # (L, N, D)
    qkv = jnp.einsum('lnd,ed->lne', xn, w_in) + b_in[0]
    q, k, v = qkv[..., :D], qkv[..., D:2 * D], qkv[..., 2 * D:]
    q = q.reshape(L, N, n_head, hd) / jnp.sqrt(hd)
    k = k.reshape(L, N, n_head, hd)
    v = v.reshape(L, N, n_head, hd)
    s = jnp.einsum('qnhd,knhd->nhqk', q, k) + mask
    p = jax.nn.softmax(s, axis=-1)
    o = jnp.einsum('nhqk,knhd->qnhd', p, v).reshape(L, N, D)
    o = jnp.einsum('lnd,ed->lne', o, w_out) + b_out[0]
    x = x + o
    xn2 = ln(x, ln2_g[0], ln2_b[0])
    h = jnp.einsum('lnd,ed->lne', xn2, w_fc) + b_fc[0]
    h = h * jax.nn.sigmoid(1.702 * h)
    y = jnp.einsum('lne,de->lnd', h, w_proj) + b_proj[0]
    return x + y


if __name__ == "__main__":
    L, N, D, H = 8, 2, 32, 4                                  # seq, batch, d_model, heads
    key = jax.random.PRNGKey(0)
    ks = jax.random.split(key, 10)

    # Deterministic synthetic parameters (shapes follow nn.MultiheadAttention / mlp).
    ln1_g = jnp.ones((1, D), jnp.float32)
    ln1_b = jnp.zeros((1, D), jnp.float32)
    ln2_g = jnp.ones((1, D), jnp.float32)
    ln2_b = jnp.zeros((1, D), jnp.float32)
    w_in = (D ** -0.5) * jax.random.normal(ks[0], (3 * D, D), jnp.float32)
    b_in = 0.01 * jax.random.normal(ks[1], (1, 3 * D), jnp.float32)
    w_out = (D ** -0.5) * jax.random.normal(ks[2], (D, D), jnp.float32)
    b_out = 0.01 * jax.random.normal(ks[3], (1, D), jnp.float32)
    w_fc = ((2 * D) ** -0.5) * jax.random.normal(ks[4], (4 * D, D), jnp.float32)
    b_fc = 0.01 * jax.random.normal(ks[5], (1, 4 * D), jnp.float32)
    w_proj = (D ** -0.5) * jax.random.normal(ks[6], (D, 4 * D), jnp.float32)
    b_proj = 0.01 * jax.random.normal(ks[7], (1, D), jnp.float32)
    params = (ln1_g, ln1_b, w_in, b_in, w_out, b_out,
              ln2_g, ln2_b, w_fc, b_fc, w_proj, b_proj)

    x = jax.random.normal(ks[8], (L, N, D), jnp.float32)

    # 1) no mask (maskless fast path), f32 compute
    out = jax.block_until_ready(residual_attention_block(x, params, H, None))
    ref = _reference(x, params, H, None)
    assert out.shape == (L, N, D)
    assert np.allclose(np.asarray(out), np.asarray(ref), atol=1e-4, rtol=1e-4)

    # 2) causal additive mask (text-CLIP style), f32 compute
    causal = jnp.where(jnp.triu(jnp.ones((L, L), bool), 1),
                       -jnp.inf, 0.0).astype(jnp.float32)
    out_m = jax.block_until_ready(residual_attention_block(x, params, H, causal))
    ref_m = _reference(x, params, H, causal)
    assert np.allclose(np.asarray(out_m), np.asarray(ref_m), atol=1e-4, rtol=1e-4)

    # 3) L not a multiple of 8 -> padded-keys path
    L2 = 6
    x2 = jax.random.normal(ks[9], (L2, N, D), jnp.float32)
    out_p = jax.block_until_ready(residual_attention_block(x2, params, H, None))
    ref_p = _reference(x2, params, H, None)
    assert out_p.shape == (L2, N, D)
    assert np.allclose(np.asarray(out_p), np.asarray(ref_p), atol=1e-4, rtol=1e-4)

    # 4) bf16 matmul operands with f32 accumulation (v6e/v7x MXU path), loose tolerance
    out_bf = jax.block_until_ready(
        residual_attention_block(x, params, H, None, compute_dtype=jnp.bfloat16))
    assert np.allclose(np.asarray(out_bf), np.asarray(ref), atol=5e-2, rtol=5e-2)

    print("KERNEL_OK")
</pallas_src>

<mosaic_0001>
module attributes {stable_mosaic.version = 11 : i64} {
  func.func @_resblock_kernel(%arg0: i32, %arg1: memref<1x8x32xf32, #tpu.memory_space<vmem>>, %arg2: memref<1x32xf32, #tpu.memory_space<vmem>>, %arg3: memref<1x32xf32, #tpu.memory_space<vmem>>, %arg4: memref<32x96xf32, #tpu.memory_space<vmem>>, %arg5: memref<1x96xf32, #tpu.memory_space<vmem>>, %arg6: memref<32x32xf32, #tpu.memory_space<vmem>>, %arg7: memref<1x32xf32, #tpu.memory_space<vmem>>, %arg8: memref<1x32xf32, #tpu.memory_space<vmem>>, %arg9: memref<1x32xf32, #tpu.memory_space<vmem>>, %arg10: memref<32x128xf32, #tpu.memory_space<vmem>>, %arg11: memref<1x128xf32, #tpu.memory_space<vmem>>, %arg12: memref<128x32xf32, #tpu.memory_space<vmem>>, %arg13: memref<1x32xf32, #tpu.memory_space<vmem>>, %arg14: memref<1x8x32xf32, #tpu.memory_space<vmem>>, %arg15: memref<8x32xf32, #tpu.memory_space<vmem>>) attributes {dimension_semantics = [#tpu.dimension_semantics<parallel>], iteration_bounds = array<i64: 2>, scalar_prefetch = 0 : i64, scratch_operands = 1 : i64, tpu.core_type = #tpu.core_type<tc>, window_params = [{transform_indices = @transform_0, window_bounds = array<i64: 1, 8, 32>}, {pipeline_mode = #tpu.pipeline_mode<synchronous>, transform_indices = @transform_1, window_bounds = array<i64: 1, 32>}, {pipeline_mode = #tpu.pipeline_mode<synchronous>, transform_indices = @transform_2, window_bounds = array<i64: 1, 32>}, {pipeline_mode = #tpu.pipeline_mode<synchronous>, transform_indices = @transform_3, window_bounds = array<i64: 32, 96>}, {pipeline_mode = #tpu.pipeline_mode<synchronous>, transform_indices = @transform_4, window_bounds = array<i64: 1, 96>}, {pipeline_mode = #tpu.pipeline_mode<synchronous>, transform_indices = @transform_5, window_bounds = array<i64: 32, 32>}, {pipeline_mode = #tpu.pipeline_mode<synchronous>, transform_indices = @transform_6, window_bounds = array<i64: 1, 32>}, {pipeline_mode = #tpu.pipeline_mode<synchronous>, transform_indices = @transform_7, window_bounds = array<i64: 1, 32>}, {pipeline_mode = #tpu.pipeline_mode<synchronous>, transform_indices = @transform_8, window_bounds = array<i64: 1, 32>}, {pipeline_mode = #tpu.pipeline_mode<synchronous>, transform_indices = @transform_9, window_bounds = array<i64: 32, 128>}, {pipeline_mode = #tpu.pipeline_mode<synchronous>, transform_indices = @transform_10, window_bounds = array<i64: 1, 128>}, {pipeline_mode = #tpu.pipeline_mode<synchronous>, transform_indices = @transform_11, window_bounds = array<i64: 128, 32>}, {pipeline_mode = #tpu.pipeline_mode<synchronous>, transform_indices = @transform_12, window_bounds = array<i64: 1, 32>}, {transform_indices = @transform_13, window_bounds = array<i64: 1, 8, 32>}]} {
    %c0 = arith.constant 0 : index
    %c0_0 = arith.constant 0 : index
    %c0_1 = arith.constant 0 : index
    %0 = vector.load %arg1[%c0, %c0_0, %c0_1] : memref<1x8x32xf32, #tpu.memory_space<vmem>>, vector<1x8x32xf32>
    %1 = vector.shape_cast %0 : vector<1x8x32xf32> to vector<8x32xf32>
    %c0_2 = arith.constant 0 : index
    %c0_3 = arith.constant 0 : index
    %2 = vector.load %arg2[%c0_2, %c0_3] : memref<1x32xf32, #tpu.memory_space<vmem>>, vector<1x32xf32>
    %c0_4 = arith.constant 0 : index
    %c0_5 = arith.constant 0 : index
    %3 = vector.load %arg3[%c0_4, %c0_5] : memref<1x32xf32, #tpu.memory_space<vmem>>, vector<1x32xf32>
    %cst = arith.constant dense<0.000000e+00> : vector<8xf32>
    %4 = vector.multi_reduction <add>, %1, %cst [1] : vector<8x32xf32> to vector<8xf32>
    %5 = vector.shape_cast %4 : vector<8xf32> to vector<8x1xf32>
    %cst_6 = arith.constant 3.200000e+01 : f32
    %6 = vector.broadcast %cst_6 : f32 to vector<8x1xf32>
    %7 = arith.divf %5, %6 : vector<8x1xf32>
    %8 = vector.broadcast %7 : vector<8x1xf32> to vector<8x32xf32>
    %9 = arith.subf %1, %8 : vector<8x32xf32>
    %10 = arith.mulf %9, %9 : vector<8x32xf32>
    %cst_7 = arith.constant dense<0.000000e+00> : vector<8xf32>
    %11 = vector.multi_reduction <add>, %10, %cst_7 [1] : vector<8x32xf32> to vector<8xf32>
    %12 = vector.shape_cast %11 : vector<8xf32> to vector<8x1xf32>
    %cst_8 = arith.constant 3.200000e+01 : f32
    %13 = vector.broadcast %cst_8 : f32 to vector<8x1xf32>
    %14 = arith.divf %12, %13 : vector<8x1xf32>
    %15 = vector.broadcast %7 : vector<8x1xf32> to vector<8x32xf32>
    %16 = arith.subf %1, %15 : vector<8x32xf32>
    %cst_9 = arith.constant 9.99999974E-6 : f32
    %17 = vector.broadcast %cst_9 : f32 to vector<8x1xf32>
    %18 = arith.addf %14, %17 : vector<8x1xf32>
    %19 = math.rsqrt %18 : vector<8x1xf32>
    %20 = vector.broadcast %19 : vector<8x1xf32> to vector<8x32xf32>
    %21 = arith.mulf %16, %20 : vector<8x32xf32>
    %22 = vector.broadcast %2 : vector<1x32xf32> to vector<8x32xf32>
    %23 = arith.mulf %21, %22 : vector<8x32xf32>
    %24 = vector.broadcast %3 : vector<1x32xf32> to vector<8x32xf32>
    %25 = arith.addf %23, %24 : vector<8x32xf32>
    %c0_10 = arith.constant 0 : index
    %c0_11 = arith.constant 0 : index
    %26 = vector.load %arg4[%c0_10, %c0_11] : memref<32x96xf32, #tpu.memory_space<vmem>>, vector<32x96xf32>
    %cst_12 = arith.constant dense<0.000000e+00> : vector<8x96xf32>
    %27 = tpu.matmul %25, %26, %cst_12 {dimension_numbers = #tpu.dot_dimension_numbers<[1], [0], [0], [1], [0, 0, 1, 1], [], []>} : vector<8x32xf32>, vector<32x96xf32>, vector<8x96xf32> -> vector<8x96xf32>
    %c0_13 = arith.constant 0 : index
    %c0_14 = arith.constant 0 : index
    %28 = vector.load %arg5[%c0_13, %c0_14] : memref<1x96xf32, #tpu.memory_space<vmem>>, vector<1x96xf32>
    %29 = vector.broadcast %28 : vector<1x96xf32> to vector<8x96xf32>
    %30 = arith.addf %27, %29 : vector<8x96xf32>
    %31 = vector.extract_strided_slice %30 {offsets = [0, 0], sizes = [8, 32], strides = [1, 1]} : vector<8x96xf32> to vector<8x32xf32>
    %32 = vector.extract_strided_slice %30 {offsets = [0, 32], sizes = [8, 32], strides = [1, 1]} : vector<8x96xf32> to vector<8x32xf32>
    %33 = vector.extract_strided_slice %30 {offsets = [0, 64], sizes = [8, 32], strides = [1, 1]} : vector<8x96xf32> to vector<8x32xf32>
    %34 = vector.extract_strided_slice %31 {offsets = [0, 0], sizes = [8, 8], strides = [1, 1]} : vector<8x32xf32> to vector<8x8xf32>
    %35 = vector.extract_strided_slice %32 {offsets = [0, 0], sizes = [8, 8], strides = [1, 1]} : vector<8x32xf32> to vector<8x8xf32>
    %36 = vector.extract_strided_slice %33 {offsets = [0, 0], sizes = [8, 8], strides = [1, 1]} : vector<8x32xf32> to vector<8x8xf32>
    %cst_15 = arith.constant dense<0.000000e+00> : vector<8x8xf32>
    %37 = tpu.matmul %34, %35, %cst_15 {dimension_numbers = #tpu.dot_dimension_numbers<[1], [1], [0], [0], [0, 0, 1, 0], [], []>} : vector<8x8xf32>, vector<8x8xf32>, vector<8x8xf32> -> vector<8x8xf32>
    %cst_16 = arith.constant dense<0xFF800000> : vector<8xf32>
    %38 = vector.multi_reduction <maximumf>, %37, %cst_16 [1] : vector<8x8xf32> to vector<8xf32>
    %39 = vector.shape_cast %38 : vector<8xf32> to vector<8x1xf32>
    %40 = vector.broadcast %39 : vector<8x1xf32> to vector<8x8xf32>
    %41 = arith.subf %37, %40 : vector<8x8xf32>
    %42 = math.exp %41 : vector<8x8xf32>
    %cst_17 = arith.constant dense<0.000000e+00> : vector<8xf32>
    %43 = vector.multi_reduction <add>, %42, %cst_17 [1] : vector<8x8xf32> to vector<8xf32>
    %44 = vector.shape_cast %43 : vector<8xf32> to vector<8x1xf32>
    %cst_18 = arith.constant dense<0.000000e+00> : vector<8x8xf32>
    %45 = tpu.matmul %42, %36, %cst_18 {dimension_numbers = #tpu.dot_dimension_numbers<[1], [0], [0], [1], [0, 0, 1, 1], [], []>} : vector<8x8xf32>, vector<8x8xf32>, vector<8x8xf32> -> vector<8x8xf32>
    %46 = tpu.reciprocal %44 : vector<8x1xf32> -> vector<8x1xf32>
    %47 = vector.broadcast %46 : vector<8x1xf32> to vector<8x8xf32>
    %48 = arith.mulf %45, %47 : vector<8x8xf32>
    %c0_19 = arith.constant 0 : index
    %c0_20 = arith.constant 0 : index
    %49 = vector.load %arg15[%c0_19, %c0_20] : memref<8x32xf32, #tpu.memory_space<vmem>>, vector<8x8xf32>
    tpu.vector_store %arg15[%c0_19, %c0_20], %48 {strides = array<i32>} : memref<8x32xf32, #tpu.memory_space<vmem>>, vector<8x8xf32>,
    %50 = vector.extract_strided_slice %31 {offsets = [0, 8], sizes = [8, 8], strides = [1, 1]} : vector<8x32xf32> to vector<8x8xf32>
    %51 = vector.extract_strided_slice %32 {offsets = [0, 8], sizes = [8, 8], strides = [1, 1]} : vector<8x32xf32> to vector<8x8xf32>
    %52 = vector.extract_strided_slice %33 {offsets = [0, 8], sizes = [8, 8], strides = [1, 1]} : vector<8x32xf32> to vector<8x8xf32>
    %cst_21 = arith.constant dense<0.000000e+00> : vector<8x8xf32>
    %53 = tpu.matmul %50, %51, %cst_21 {dimension_numbers = #tpu.dot_dimension_numbers<[1], [1], [0], [0], [0, 0, 1, 0], [], []>} : vector<8x8xf32>, vector<8x8xf32>, vector<8x8xf32> -> vector<8x8xf32>
    %cst_22 = arith.constant dense<0xFF800000> : vector<8xf32>
    %54 = vector.multi_reduction <maximumf>, %53, %cst_22 [1] : vector<8x8xf32> to vector<8xf32>
    %55 = vector.shape_cast %54 : vector<8xf32> to vector<8x1xf32>
    %56 = vector.broadcast %55 : vector<8x1xf32> to vector<8x8xf32>
    %57 = arith.subf %53, %56 : vector<8x8xf32>
    %58 = math.exp %57 : vector<8x8xf32>
    %cst_23 = arith.constant dense<0.000000e+00> : vector<8xf32>
    %59 = vector.multi_reduction <add>, %58, %cst_23 [1] : vector<8x8xf32> to vector<8xf32>
    %60 = vector.shape_cast %59 : vector<8xf32> to vector<8x1xf32>
    %cst_24 = arith.constant dense<0.000000e+00> : vector<8x8xf32>
    %61 = tpu.matmul %58, %52, %cst_24 {dimension_numbers = #tpu.dot_dimension_numbers<[1], [0], [0], [1], [0, 0, 1, 1], [], []>} : vector<8x8xf32>, vector<8x8xf32>, vector<8x8xf32> -> vector<8x8xf32>
    %62 = tpu.reciprocal %60 : vector<8x1xf32> -> vector<8x1xf32>
    %63 = vector.broadcast %62 : vector<8x1xf32> to vector<8x8xf32>
    %64 = arith.mulf %61, %63 : vector<8x8xf32>
    %c0_25 = arith.constant 0 : index
    %c8 = arith.constant 8 : index
    %65 = vector.load %arg15[%c0_25, %c8] : memref<8x32xf32, #tpu.memory_space<vmem>>, vector<8x8xf32>
    tpu.vector_store %arg15[%c0_25, %c8], %64 {strides = array<i32>} : memref<8x32xf32, #tpu.memory_space<vmem>>, vector<8x8xf32>,
    %66 = vector.extract_strided_slice %31 {offsets = [0, 16], sizes = [8, 8], strides = [1, 1]} : vector<8x32xf32> to vector<8x8xf32>
    %67 = vector.extract_strided_slice %32 {offsets = [0, 16], sizes = [8, 8], strides = [1, 1]} : vector<8x32xf32> to vector<8x8xf32>
    %68 = vector.extract_strided_slice %33 {offsets = [0, 16], sizes = [8, 8], strides = [1, 1]} : vector<8x32xf32> to vector<8x8xf32>
    %cst_26 = arith.constant dense<0.000000e+00> : vector<8x8xf32>
    %69 = tpu.matmul %66, %67, %cst_26 {dimension_numbers = #tpu.dot_dimension_numbers<[1], [1], [0], [0], [0, 0, 1, 0], [], []>} : vector<8x8xf32>, vector<8x8xf32>, vector<8x8xf32> -> vector<8x8xf32>
    %cst_27 = arith.constant dense<0xFF800000> : vector<8xf32>
    %70 = vector.multi_reduction <maximumf>, %69, %cst_27 [1] : vector<8x8xf32> to vector<8xf32>
    %71 = vector.shape_cast %70 : vector<8xf32> to vector<8x1xf32>
    %72 = vector.broadcast %71 : vector<8x1xf32> to vector<8x8xf32>
    %73 = arith.subf %69, %72 : vector<8x8xf32>
    %74 = math.exp %73 : vector<8x8xf32>
    %cst_28 = arith.constant dense<0.000000e+00> : vector<8xf32>
    %75 = vector.multi_reduction <add>, %74, %cst_28 [1] : vector<8x8xf32> to vector<8xf32>
    %76 = vector.shape_cast %75 : vector<8xf32> to vector<8x1xf32>
    %cst_29 = arith.constant dense<0.000000e+00> : vector<8x8xf32>
    %77 = tpu.matmul %74, %68, %cst_29 {dimension_numbers = #tpu.dot_dimension_numbers<[1], [0], [0], [1], [0, 0, 1, 1], [], []>} : vector<8x8xf32>, vector<8x8xf32>, vector<8x8xf32> -> vector<8x8xf32>
    %78 = tpu.reciprocal %76 : vector<8x1xf32> -> vector<8x1xf32>
    %79 = vector.broadcast %78 : vector<8x1xf32> to vector<8x8xf32>
    %80 = arith.mulf %77, %79 : vector<8x8xf32>
    %c0_30 = arith.constant 0 : index
    %c16 = arith.constant 16 : index
    %81 = vector.load %arg15[%c0_30, %c16] : memref<8x32xf32, #tpu.memory_space<vmem>>, vector<8x8xf32>
    tpu.vector_store %arg15[%c0_30, %c16], %80 {strides = array<i32>} : memref<8x32xf32, #tpu.memory_space<vmem>>, vector<8x8xf32>,
    %82 = vector.extract_strided_slice %31 {offsets = [0, 24], sizes = [8, 8], strides = [1, 1]} : vector<8x32xf32> to vector<8x8xf32>
    %83 = vector.extract_strided_slice %32 {offsets = [0, 24], sizes = [8, 8], strides = [1, 1]} : vector<8x32xf32> to vector<8x8xf32>
    %84 = vector.extract_strided_slice %33 {offsets = [0, 24], sizes = [8, 8], strides = [1, 1]} : vector<8x32xf32> to vector<8x8xf32>
    %cst_31 = arith.constant dense<0.000000e+00> : vector<8x8xf32>
    %85 = tpu.matmul %82, %83, %cst_31 {dimension_numbers = #tpu.dot_dimension_numbers<[1], [1], [0], [0], [0, 0, 1, 0], [], []>} : vector<8x8xf32>, vector<8x8xf32>, vector<8x8xf32> -> vector<8x8xf32>
    %cst_32 = arith.constant dense<0xFF800000> : vector<8xf32>
    %86 = vector.multi_reduction <maximumf>, %85, %cst_32 [1] : vector<8x8xf32> to vector<8xf32>
    %87 = vector.shape_cast %86 : vector<8xf32> to vector<8x1xf32>
    %88 = vector.broadcast %87 : vector<8x1xf32> to vector<8x8xf32>
    %89 = arith.subf %85, %88 : vector<8x8xf32>
    %90 = math.exp %89 : vector<8x8xf32>
    %cst_33 = arith.constant dense<0.000000e+00> : vector<8xf32>
    %91 = vector.multi_reduction <add>, %90, %cst_33 [1] : vector<8x8xf32> to vector<8xf32>
    %92 = vector.shape_cast %91 : vector<8xf32> to vector<8x1xf32>
    %cst_34 = arith.constant dense<0.000000e+00> : vector<8x8xf32>
    %93 = tpu.matmul %90, %84, %cst_34 {dimension_numbers = #tpu.dot_dimension_numbers<[1], [0], [0], [1], [0, 0, 1, 1], [], []>} : vector<8x8xf32>, vector<8x8xf32>, vector<8x8xf32> -> vector<8x8xf32>
    %94 = tpu.reciprocal %92 : vector<8x1xf32> -> vector<8x1xf32>
    %95 = vector.broadcast %94 : vector<8x1xf32> to vector<8x8xf32>
    %96 = arith.mulf %93, %95 : vector<8x8xf32>
    %c0_35 = arith.constant 0 : index
    %c24 = arith.constant 24 : index
    %97 = vector.load %arg15[%c0_35, %c24] : memref<8x32xf32, #tpu.memory_space<vmem>>, vector<8x8xf32>
    tpu.vector_store %arg15[%c0_35, %c24], %96 {strides = array<i32>} : memref<8x32xf32, #tpu.memory_space<vmem>>, vector<8x8xf32>,
    %c0_36 = arith.constant 0 : index
    %c0_37 = arith.constant 0 : index
    %98 = vector.load %arg15[%c0_36, %c0_37] : memref<8x32xf32, #tpu.memory_space<vmem>>, vector<8x32xf32>
    %c0_38 = arith.constant 0 : index
    %c0_39 = arith.constant 0 : index
    %99 = vector.load %arg6[%c0_38, %c0_39] : memref<32x32xf32, #tpu.memory_space<vmem>>, vector<32x32xf32>
    %cst_40 = arith.constant dense<0.000000e+00> : vector<8x32xf32>
    %100 = tpu.matmul %98, %99, %cst_40 {dimension_numbers = #tpu.dot_dimension_numbers<[1], [0], [0], [1], [0, 0, 1, 1], [], []>} : vector<8x32xf32>, vector<32x32xf32>, vector<8x32xf32> -> vector<8x32xf32>
    %c0_41 = arith.constant 0 : index
    %c0_42 = arith.constant 0 : index
    %101 = vector.load %arg7[%c0_41, %c0_42] : memref<1x32xf32, #tpu.memory_space<vmem>>, vector<1x32xf32>
    %102 = vector.broadcast %101 : vector<1x32xf32> to vector<8x32xf32>
    %103 = arith.addf %100, %102 : vector<8x32xf32>
    %104 = arith.addf %1, %103 : vector<8x32xf32>
    %c0_43 = arith.constant 0 : index
    %c0_44 = arith.constant 0 : index
    %105 = vector.load %arg8[%c0_43, %c0_44] : memref<1x32xf32, #tpu.memory_space<vmem>>, vector<1x32xf32>
    %c0_45 = arith.constant 0 : index
    %c0_46 = arith.constant 0 : index
    %106 = vector.load %arg9[%c0_45, %c0_46] : memref<1x32xf32, #tpu.memory_space<vmem>>, vector<1x32xf32>
    %cst_47 = arith.constant dense<0.000000e+00> : vector<8xf32>
    %107 = vector.multi_reduction <add>, %104, %cst_47 [1] : vector<8x32xf32> to vector<8xf32>
    %108 = vector.shape_cast %107 : vector<8xf32> to vector<8x1xf32>
    %cst_48 = arith.constant 3.200000e+01 : f32
    %109 = vector.broadcast %cst_48 : f32 to vector<8x1xf32>
    %110 = arith.divf %108, %109 : vector<8x1xf32>
    %111 = vector.broadcast %110 : vector<8x1xf32> to vector<8x32xf32>
    %112 = arith.subf %104, %111 : vector<8x32xf32>
    %113 = arith.mulf %112, %112 : vector<8x32xf32>
    %cst_49 = arith.constant dense<0.000000e+00> : vector<8xf32>
    %114 = vector.multi_reduction <add>, %113, %cst_49 [1] : vector<8x32xf32> to vector<8xf32>
    %115 = vector.shape_cast %114 : vector<8xf32> to vector<8x1xf32>
    %cst_50 = arith.constant 3.200000e+01 : f32
    %116 = vector.broadcast %cst_50 : f32 to vector<8x1xf32>
    %117 = arith.divf %115, %116 : vector<8x1xf32>
    %118 = vector.broadcast %110 : vector<8x1xf32> to vector<8x32xf32>
    %119 = arith.subf %104, %118 : vector<8x32xf32>
    %cst_51 = arith.constant 9.99999974E-6 : f32
    %120 = vector.broadcast %cst_51 : f32 to vector<8x1xf32>
    %121 = arith.addf %117, %120 : vector<8x1xf32>
    %122 = math.rsqrt %121 : vector<8x1xf32>
    %123 = vector.broadcast %122 : vector<8x1xf32> to vector<8x32xf32>
    %124 = arith.mulf %119, %123 : vector<8x32xf32>
    %125 = vector.broadcast %105 : vector<1x32xf32> to vector<8x32xf32>
    %126 = arith.mulf %124, %125 : vector<8x32xf32>
    %127 = vector.broadcast %106 : vector<1x32xf32> to vector<8x32xf32>
    %128 = arith.addf %126, %127 : vector<8x32xf32>
    %c0_52 = arith.constant 0 : index
    %c0_53 = arith.constant 0 : index
    %129 = vector.load %arg10[%c0_52, %c0_53] : memref<32x128xf32, #tpu.memory_space<vmem>>, vector<32x128xf32>
    %cst_54 = arith.constant dense<0.000000e+00> : vector<8x128xf32>
    %130 = tpu.matmul %128, %129, %cst_54 {dimension_numbers = #tpu.dot_dimension_numbers<[1], [0], [0], [1], [0, 0, 1, 1], [], []>} : vector<8x32xf32>, vector<32x128xf32>, vector<8x128xf32> -> vector<8x128xf32>
    %c0_55 = arith.constant 0 : index
    %c0_56 = arith.constant 0 : index
    %131 = vector.load %arg11[%c0_55, %c0_56] : memref<1x128xf32, #tpu.memory_space<vmem>>, vector<1x128xf32>
    %132 = vector.broadcast %131 : vector<1x128xf32> to vector<8x128xf32>
    %133 = arith.addf %130, %132 : vector<8x128xf32>
    %cst_57 = arith.constant 1.702000e+00 : f32
    %134 = vector.broadcast %cst_57 : f32 to vector<8x128xf32>
    %135 = arith.mulf %134, %133 : vector<8x128xf32>
    %136 = arith.negf %135 : vector<8x128xf32>
    %137 = math.exp %136 : vector<8x128xf32>
    %cst_58 = arith.constant 1.000000e+00 : f32
    %138 = vector.broadcast %cst_58 : f32 to vector<8x128xf32>
    %139 = arith.addf %138, %137 : vector<8x128xf32>
    %140 = arith.divf %138, %139 : vector<8x128xf32>
    %141 = arith.mulf %133, %140 : vector<8x128xf32>
    %c0_59 = arith.constant 0 : index
    %c0_60 = arith.constant 0 : index
    %142 = vector.load %arg12[%c0_59, %c0_60] : memref<128x32xf32, #tpu.memory_space<vmem>>, vector<128x32xf32>
    %cst_61 = arith.constant dense<0.000000e+00> : vector<8x32xf32>
    %143 = tpu.matmul %141, %142, %cst_61 {dimension_numbers = #tpu.dot_dimension_numbers<[1], [0], [0], [1], [0, 0, 1, 1], [], []>} : vector<8x128xf32>, vector<128x32xf32>, vector<8x32xf32> -> vector<8x32xf32>
    %c0_62 = arith.constant 0 : index
    %c0_63 = arith.constant 0 : index
    %144 = vector.load %arg13[%c0_62, %c0_63] : memref<1x32xf32, #tpu.memory_space<vmem>>, vector<1x32xf32>
    %145 = vector.broadcast %144 : vector<1x32xf32> to vector<8x32xf32>
    %146 = arith.addf %143, %145 : vector<8x32xf32>
    %147 = arith.addf %104, %146 : vector<8x32xf32>
    %c0_64 = arith.constant 0 : index
    %c0_65 = arith.constant 0 : index
    %c0_66 = arith.constant 0 : index
    %148 = vector.load %arg14[%c0_64, %c0_65, %c0_66] : memref<1x8x32xf32, #tpu.memory_space<vmem>>, vector<1x8x32xf32>
    %149 = vector.shape_cast %148 : vector<1x8x32xf32> to vector<8x32xf32>
    %150 = vector.shape_cast %147 : vector<8x32xf32> to vector<1x8x32xf32>
    tpu.vector_store %arg14[%c0_64, %c0_65, %c0_66], %150 {strides = array<i32>} : memref<1x8x32xf32, #tpu.memory_space<vmem>>, vector<1x8x32xf32>,
    return
  }
  func.func @transform_0(%arg0: i32) -> (i32, i32, i32) {
    %c0_i32 = arith.constant 0 : i32
    %c0_i32_0 = arith.constant 0 : i32
    %c0_i32_1 = arith.constant 0 : i32
    return %arg0, %c0_i32, %c0_i32_0 : i32, i32, i32
  }
  func.func @transform_1(%arg0: i32) -> (i32, i32) {
    %c0_i32 = arith.constant 0 : i32
    %c0_i32_0 = arith.constant 0 : i32
    %c0_i32_1 = arith.constant 0 : i32
    return %c0_i32, %c0_i32_0 : i32, i32
  }
  func.func @transform_2(%arg0: i32) -> (i32, i32) {
    %c0_i32 = arith.constant 0 : i32
    %c0_i32_0 = arith.constant 0 : i32
    %c0_i32_1 = arith.constant 0 : i32
    return %c0_i32, %c0_i32_0 : i32, i32
  }
  func.func @transform_3(%arg0: i32) -> (i32, i32) {
    %c0_i32 = arith.constant 0 : i32
    %c0_i32_0 = arith.constant 0 : i32
    %c0_i32_1 = arith.constant 0 : i32
    return %c0_i32, %c0_i32_0 : i32, i32
  }
  func.func @transform_4(%arg0: i32) -> (i32, i32) {
    %c0_i32 = arith.constant 0 : i32
    %c0_i32_0 = arith.constant 0 : i32
    %c0_i32_1 = arith.constant 0 : i32
    return %c0_i32, %c0_i32_0 : i32, i32
  }
  func.func @transform_5(%arg0: i32) -> (i32, i32) {
    %c0_i32 = arith.constant 0 : i32
    %c0_i32_0 = arith.constant 0 : i32
    %c0_i32_1 = arith.constant 0 : i32
    return %c0_i32, %c0_i32_0 : i32, i32
  }
  func.func @transform_6(%arg0: i32) -> (i32, i32) {
    %c0_i32 = arith.constant 0 : i32
    %c0_i32_0 = arith.constant 0 : i32
    %c0_i32_1 = arith.constant 0 : i32
    return %c0_i32, %c0_i32_0 : i32, i32
  }
  func.func @transform_7(%arg0: i32) -> (i32, i32) {
    %c0_i32 = arith.constant 0 : i32
    %c0_i32_0 = arith.constant 0 : i32
    %c0_i32_1 = arith.constant 0 : i32
    return %c0_i32, %c0_i32_0 : i32, i32
  }
  func.func @transform_8(%arg0: i32) -> (i32, i32) {
    %c0_i32 = arith.constant 0 : i32
    %c0_i32_0 = arith.constant 0 : i32
    %c0_i32_1 = arith.constant 0 : i32
    return %c0_i32, %c0_i32_0 : i32, i32
  }
  func.func @transform_9(%arg0: i32) -> (i32, i32) {
    %c0_i32 = arith.constant 0 : i32
    %c0_i32_0 = arith.constant 0 : i32
    %c0_i32_1 = arith.constant 0 : i32
    return %c0_i32, %c0_i32_0 : i32, i32
  }
  func.func @transform_10(%arg0: i32) -> (i32, i32) {
    %c0_i32 = arith.constant 0 : i32
    %c0_i32_0 = arith.constant 0 : i32
    %c0_i32_1 = arith.constant 0 : i32
    return %c0_i32, %c0_i32_0 : i32, i32
  }
  func.func @transform_11(%arg0: i32) -> (i32, i32) {
    %c0_i32 = arith.constant 0 : i32
    %c0_i32_0 = arith.constant 0 : i32
    %c0_i32_1 = arith.constant 0 : i32
    return %c0_i32, %c0_i32_0 : i32, i32
  }
  func.func @transform_12(%arg0: i32) -> (i32, i32) {
    %c0_i32 = arith.constant 0 : i32
    %c0_i32_0 = arith.constant 0 : i32
    %c0_i32_1 = arith.constant 0 : i32
    return %c0_i32, %c0_i32_0 : i32, i32
  }
  func.func @transform_13(%arg0: i32) -> (i32, i32, i32) {
    %c0_i32 = arith.constant 0 : i32
    %c0_i32_0 = arith.constant 0 : i32
    %c0_i32_1 = arith.constant 0 : i32
    return %arg0, %c0_i32, %c0_i32_0 : i32, i32, i32
  }
}

</mosaic_0001>

<llo_original>
// kernel: tpu_custom_call.1
$region0: #{tpu_custom_call.1}
  #allocation0 [shape = 'u32[]', space=smem, size = 0x4, offset = 0x4, fixed_abs, tag = 'smem constant byte address 0x4 - core index']
  #allocation1 [shape = 'u32[144,128]{1,0:T(1,128)}', space=vmem, size = 0x12000, scoped, tag = 'internal scratch']
  #allocation2 [shape = 'f32[8,32]{1,0:T(8,128)}', space=vmem, size = 0x1000, scoped, tag = 'scratch operand']
  %s0 = inlined_call_operand.vmem [shape: f32[2,8,32], index: 0, kind: input, shape index: {}]
  %s1 = inlined_call_operand.vmem [shape: f32[1,32], index: 1, kind: input, shape index: {}]
  %s2 = inlined_call_operand.vmem [shape: f32[1,32], index: 2, kind: input, shape index: {}]
  %s3 = inlined_call_operand.vmem [shape: f32[32,96], index: 3, kind: input, shape index: {}]
  %s4 = inlined_call_operand.vmem [shape: f32[1,96], index: 4, kind: input, shape index: {}]
  %s5 = inlined_call_operand.vmem [shape: f32[32,32], index: 5, kind: input, shape index: {}]
  %s6 = inlined_call_operand.vmem [shape: f32[1,32], index: 6, kind: input, shape index: {}]
  %s7 = inlined_call_operand.vmem [shape: f32[1,32], index: 7, kind: input, shape index: {}]
  %s8 = inlined_call_operand.vmem [shape: f32[1,32], index: 8, kind: input, shape index: {}]
  %s9 = inlined_call_operand.vmem [shape: f32[32,128], index: 9, kind: input, shape index: {}]
  %s10 = inlined_call_operand.vmem [shape: f32[1,128], index: 10, kind: input, shape index: {}]
  %s11 = inlined_call_operand.vmem [shape: f32[128,32], index: 11, kind: input, shape index: {}]
  %s12 = inlined_call_operand.vmem [shape: f32[1,32], index: 12, kind: input, shape index: {}]
  %s13 = inlined_call_operand.hbm [shape: f32[2,8,32], index: 13, kind: output, shape index: {}]
  %s14 = sld [smem:[#allocation0]]
  $region85: #{tpu_custom_call.1} parent=0
    _
  %s16 = ssub.s32 1, %s14
  %s17 = scalar_select 0, %s16, %s14
  $region1: #{tpu_custom_call.1} parent=0
    #allocation3 [shape = 'u8[8192]{0}', space=vmem, size = 0x2000, scoped, tag = 'output window, operand 0']
    #allocation4 [shape = 's32[2]{0}', space=sflag, size = 0x8, scoped, tag = 'scoped memory for tpu_custom_call.1']
    %18 = vsyncpa [#allocation4], 0
    %s19 = scalar_lea.sflag [#allocation4], 1
    %20 = vsyncpa %s19, 0
    loop: start=0, step=1, limit=4
    $region2: #{tpu_custom_call.1} parent=1 // loop_pre_header
      _
    $region3: #{tpu_custom_call.1} parent=1 // loop_header
      %s22 = sphi 0, %s26
      %p23 = scmp.ge.s32.totalorder %s22, 4
      %s32 = sphi 0, %s34
      %s35 = sphi 0, %s32
      %s36 = sphi 0, %s35
      %s52 = sphi 0, %s36
      %s56 = sphi 0, %s56
      %s58 = sphi 0, %s56
      %s59 = sphi 0, %s58
      %s73 = sphi 0, %s59
      %s77 = sphi 0, %s77
      %s79 = sphi 0, %s77
      %s80 = sphi 0, %s79
      %s94 = sphi 0, %s80
      %s98 = sphi 0, %s98
      %s100 = sphi 0, %s98
      %s101 = sphi 0, %s100
      %s115 = sphi 0, %s101
      %s119 = sphi 0, %s119
      %s121 = sphi 0, %s119
      %s122 = sphi 0, %s121
      %s136 = sphi 0, %s122
      %s140 = sphi 0, %s140
      %s142 = sphi 0, %s140
      %s143 = sphi 0, %s142
      %s157 = sphi 0, %s143
      %s161 = sphi 0, %s161
      %s163 = sphi 0, %s161
      %s164 = sphi 0, %s163
      %s178 = sphi 0, %s164
      %s182 = sphi 0, %s182
      %s184 = sphi 0, %s182
      %s185 = sphi 0, %s184
      %s199 = sphi 0, %s185
      %s203 = sphi 0, %s203
      %s205 = sphi 0, %s203
      %s206 = sphi 0, %s205
      %s220 = sphi 0, %s206
      %s224 = sphi 0, %s224
      %s226 = sphi 0, %s224
      %s227 = sphi 0, %s226
      %s241 = sphi 0, %s227
      %s245 = sphi 0, %s245
      %s247 = sphi 0, %s245
      %s248 = sphi 0, %s247
      %s262 = sphi 0, %s248
      %s266 = sphi 0, %s266
      %s268 = sphi 0, %s266
      %s269 = sphi 0, %s268
      %s283 = sphi 0, %s269
      %s287 = sphi 0, %s287
      %s289 = sphi 0, %s287
      %s290 = sphi 0, %s289
      %s304 = sphi 0, %s290
      %s310 = sphi 0, %s312
      %s313 = sphi 0, %s310
      %s314 = sphi 0, %s313
      %s330 = sphi 0, %s314
    $region4: #{tpu_custom_call.1} parent=1 // loop_header_branch
      %25 = sbr.rel (%p23) target = $region8
    $region5: #{tpu_custom_call.1} parent=1 // loop_body
      %s27 = ssub.s32 %s22, 1
      %s28 = ssub.s32 %s22, 2
      %s29 = sadd.s32 %s22, 1
      %s30 = ssub.s32 %s22, %s29
      %p31 = scmp.eq.s32.totalorder %s30, 0
      %s33 = sadd.s32 %s32, 1
      %s34 = scalar_select %p31, %s32, %s33
      %p37 = pneg %p31
      %p38 = scmp.eq.s32.totalorder %s22, 1
      %p39 = por %p37, %p38
      %p40 = scmp.ne.s32.totalorder %s32, %s35
      %p41 = scmp.eq.s32.totalorder %s22, 0
      %p42 = por %p40, %p41
      %p43 = scmp.ne.s32.totalorder %s32, %s35
      %p44 = scmp.eq.s32.totalorder %s27, 1
      %p45 = por %p43, %p44
      %p46 = scmp.ne.s32.totalorder %s35, %s36
      %p47 = scmp.eq.s32.totalorder %s27, 0
      %p48 = por %p46, %p47
      %p49 = scmp.ne.s32.totalorder %s35, %s36
      %p50 = scmp.eq.s32.totalorder %s28, 1
      %p51 = por %p49, %p50
      %p53 = scmp.ne.s32.totalorder %s36, %s52
      %p54 = scmp.eq.s32.totalorder %s28, 0
      %p55 = por %p53, %p54
      %s57 = sadd.s32 %s56, 1
      %p60 = scmp.eq.s32.totalorder %s22, 1
      %p61 = scmp.ne.s32.totalorder %s56, %s58
      %p62 = scmp.eq.s32.totalorder %s22, 0
      %p63 = por %p61, %p62
      %p64 = scmp.ne.s32.totalorder %s56, %s58
      %p65 = scmp.eq.s32.totalorder %s27, 1
      %p66 = por %p64, %p65
      %p67 = scmp.ne.s32.totalorder %s58, %s59
      %p68 = scmp.eq.s32.totalorder %s27, 0
      %p69 = por %p67, %p68
      %p70 = scmp.ne.s32.totalorder %s58, %s59
      %p71 = scmp.eq.s32.totalorder %s28, 1
      %p72 = por %p70, %p71
      %p74 = scmp.ne.s32.totalorder %s59, %s73
      %p75 = scmp.eq.s32.totalorder %s28, 0
      %p76 = por %p74, %p75
      %s78 = sadd.s32 %s77, 1
      %p81 = scmp.eq.s32.totalorder %s22, 1
      %p82 = scmp.ne.s32.totalorder %s77, %s79
      %p83 = scmp.eq.s32.totalorder %s22, 0
      %p84 = por %p82, %p83
      %p85 = scmp.ne.s32.totalorder %s77, %s79
      %p86 = scmp.eq.s32.totalorder %s27, 1
      %p87 = por %p85, %p86
      %p88 = scmp.ne.s32.totalorder %s79, %s80
      %p89 = scmp.eq.s32.totalorder %s27, 0
      %p90 = por %p88, %p89
      %p91 = scmp.ne.s32.totalorder %s79, %s80
      %p92 = scmp.eq.s32.totalorder %s28, 1
      %p93 = por %p91, %p92
      %p95 = scmp.ne.s32.totalorder %s80, %s94
      %p96 = scmp.eq.s32.totalorder %s28, 0
      %p97 = por %p95, %p96
      %s99 = sadd.s32 %s98, 1
      %p102 = scmp.eq.s32.totalorder %s22, 1
      %p103 = scmp.ne.s32.totalorder %s98, %s100
      %p104 = scmp.eq.s32.totalorder %s22, 0
      %p105 = por %p103, %p104
      %p106 = scmp.ne.s32.totalorder %s98, %s100
      %p107 = scmp.eq.s32.totalorder %s27, 1
      %p108 = por %p106, %p107
      %p109 = scmp.ne.s32.totalorder %s100, %s101
      %p110 = scmp.eq.s32.totalorder %s27, 0
      %p111 = por %p109, %p110
      %p112 = scmp.ne.s32.totalorder %s100, %s101
      %p113 = scmp.eq.s32.totalorder %s28, 1
      %p114 = por %p112, %p113
      %p116 = scmp.ne.s32.totalorder %s101, %s115
      %p117 = scmp.eq.s32.totalorder %s28, 0
      %p118 = por %p116, %p117
      %s120 = sadd.s32 %s119, 1
      %p123 = scmp.eq.s32.totalorder %s22, 1
      %p124 = scmp.ne.s32.totalorder %s119, %s121
      %p125 = scmp.eq.s32.totalorder %s22, 0
      %p126 = por %p124, %p125
      %p127 = scmp.ne.s32.totalorder %s119, %s121
      %p128 = scmp.eq.s32.totalorder %s27, 1
      %p129 = por %p127, %p128
      %p130 = scmp.ne.s32.totalorder %s121, %s122
      %p131 = scmp.eq.s32.totalorder %s27, 0
      %p132 = por %p130, %p131
      %p133 = scmp.ne.s32.totalorder %s121, %s122
      %p134 = scmp.eq.s32.totalorder %s28, 1
      %p135 = por %p133, %p134
      %p137 = scmp.ne.s32.totalorder %s122, %s136
      %p138 = scmp.eq.s32.totalorder %s28, 0
      %p139 = por %p137, %p138
      %s141 = sadd.s32 %s140, 1
      %p144 = scmp.eq.s32.totalorder %s22, 1
      %p145 = scmp.ne.s32.totalorder %s140, %s142
      %p146 = scmp.eq.s32.totalorder %s22, 0
      %p147 = por %p145, %p146
      %p148 = scmp.ne.s32.totalorder %s140, %s142
      %p149 = scmp.eq.s32.totalorder %s27, 1
      %p150 = por %p148, %p149
      %p151 = scmp.ne.s32.totalorder %s142, %s143
      %p152 = scmp.eq.s32.totalorder %s27, 0
      %p153 = por %p151, %p152
      %p154 = scmp.ne.s32.totalorder %s142, %s143
      %p155 = scmp.eq.s32.totalorder %s28, 1
      %p156 = por %p154, %p155
      %p158 = scmp.ne.s32.totalorder %s143, %s157
      %p159 = scmp.eq.s32.totalorder %s28, 0
      %p160 = por %p158, %p159
      %s162 = sadd.s32 %s161, 1
      %p165 = scmp.eq.s32.totalorder %s22, 1
      %p166 = scmp.ne.s32.totalorder %s161, %s163
      %p167 = scmp.eq.s32.totalorder %s22, 0
      %p168 = por %p166, %p167
      %p169 = scmp.ne.s32.totalorder %s161, %s163
      %p170 = scmp.eq.s32.totalorder %s27, 1
      %p171 = por %p169, %p170
      %p172 = scmp.ne.s32.totalorder %s163, %s164
      %p173 = scmp.eq.s32.totalorder %s27, 0
      %p174 = por %p172, %p173
      %p175 = scmp.ne.s32.totalorder %s163, %s164
      %p176 = scmp.eq.s32.totalorder %s28, 1
      %p177 = por %p175, %p176
      %p179 = scmp.ne.s32.totalorder %s164, %s178
      %p180 = scmp.eq.s32.totalorder %s28, 0
      %p181 = por %p179, %p180
      %s183 = sadd.s32 %s182, 1
      %p186 = scmp.eq.s32.totalorder %s22, 1
      %p187 = scmp.ne.s32.totalorder %s182, %s184
      %p188 = scmp.eq.s32.totalorder %s22, 0
      %p189 = por %p187, %p188
      %p190 = scmp.ne.s32.totalorder %s182, %s184
      %p191 = scmp.eq.s32.totalorder %s27, 1
      %p192 = por %p190, %p191
      %p193 = scmp.ne.s32.totalorder %s184, %s185
      %p194 = scmp.eq.s32.totalorder %s27, 0
      %p195 = por %p193, %p194
      %p196 = scmp.ne.s32.totalorder %s184, %s185
      %p197 = scmp.eq.s32.totalorder %s28, 1
      %p198 = por %p196, %p197
      %p200 = scmp.ne.s32.totalorder %s185, %s199
      %p201 = scmp.eq.s32.totalorder %s28, 0
      %p202 = por %p200, %p201
      %s204 = sadd.s32 %s203, 1
      %p207 = scmp.eq.s32.totalorder %s22, 1
      %p208 = scmp.ne.s32.totalorder %s203, %s205
      %p209 = scmp.eq.s32.totalorder %s22, 0
      %p210 = por %p208, %p209
      %p211 = scmp.ne.s32.totalorder %s203, %s205
      %p212 = scmp.eq.s32.totalorder %s27, 1
      %p213 = por %p211, %p212
      %p214 = scmp.ne.s32.totalorder %s205, %s206
      %p215 = scmp.eq.s32.totalorder %s27, 0
      %p216 = por %p214, %p215
      %p217 = scmp.ne.s32.totalorder %s205, %s206
      %p218 = scmp.eq.s32.totalorder %s28, 1
      %p219 = por %p217, %p218
      %p221 = scmp.ne.s32.totalorder %s206, %s220
      %p222 = scmp.eq.s32.totalorder %s28, 0
      %p223 = por %p221, %p222
      %s225 = sadd.s32 %s224, 1
      %p228 = scmp.eq.s32.totalorder %s22, 1
      %p229 = scmp.ne.s32.totalorder %s224, %s226
      %p230 = scmp.eq.s32.totalorder %s22, 0
      %p231 = por %p229, %p230
      %p232 = scmp.ne.s32.totalorder %s224, %s226
      %p233 = scmp.eq.s32.totalorder %s27, 1
      %p234 = por %p232, %p233
      %p235 = scmp.ne.s32.totalorder %s226, %s227
      %p236 = scmp.eq.s32.totalorder %s27, 0
      %p237 = por %p235, %p236
      %p238 = scmp.ne.s32.totalorder %s226, %s227
      %p239 = scmp.eq.s32.totalorder %s28, 1
      %p240 = por %p238, %p239
      %p242 = scmp.ne.s32.totalorder %s227, %s241
      %p243 = scmp.eq.s32.totalorder %s28, 0
      %p244 = por %p242, %p243
      %s246 = sadd.s32 %s245, 1
      %p249 = scmp.eq.s32.totalorder %s22, 1
      %p250 = scmp.ne.s32.totalorder %s245, %s247
      %p251 = scmp.eq.s32.totalorder %s22, 0
      %p252 = por %p250, %p251
      %p253 = scmp.ne.s32.totalorder %s245, %s247
      %p254 = scmp.eq.s32.totalorder %s27, 1
      %p255 = por %p253, %p254
      %p256 = scmp.ne.s32.totalorder %s247, %s248
      %p257 = scmp.eq.s32.totalorder %s27, 0
      %p258 = por %p256, %p257
      %p259 = scmp.ne.s32.totalorder %s247, %s248
      %p260 = scmp.eq.s32.totalorder %s28, 1
      %p261 = por %p259, %p260
      %p263 = scmp.ne.s32.totalorder %s248, %s262
      %p264 = scmp.eq.s32.totalorder %s28, 0
      %p265 = por %p263, %p264
      %s267 = sadd.s32 %s266, 1
      %p270 = scmp.eq.s32.totalorder %s22, 1
      %p271 = scmp.ne.s32.totalorder %s266, %s268
      %p272 = scmp.eq.s32.totalorder %s22, 0
      %p273 = por %p271, %p272
      %p274 = scmp.ne.s32.totalorder %s266, %s268
      %p275 = scmp.eq.s32.totalorder %s27, 1
      %p276 = por %p274, %p275
      %p277 = scmp.ne.s32.totalorder %s268, %s269
      %p278 = scmp.eq.s32.totalorder %s27, 0
      %p279 = por %p277, %p278
      %p280 = scmp.ne.s32.totalorder %s268, %s269
      %p281 = scmp.eq.s32.totalorder %s28, 1
      %p282 = por %p280, %p281
      %p284 = scmp.ne.s32.totalorder %s269, %s283
      %p285 = scmp.eq.s32.totalorder %s28, 0
      %p286 = por %p284, %p285
      %s288 = sadd.s32 %s287, 1
      %p291 = scmp.eq.s32.totalorder %s22, 1
      %p292 = scmp.ne.s32.totalorder %s287, %s289
      %p293 = scmp.eq.s32.totalorder %s22, 0
      %p294 = por %p292, %p293
      %p295 = scmp.ne.s32.totalorder %s287, %s289
      %p296 = scmp.eq.s32.totalorder %s27, 1
      %p297 = por %p295, %p296
      %p298 = scmp.ne.s32.totalorder %s289, %s290
      %p299 = scmp.eq.s32.totalorder %s27, 0
      %p300 = por %p298, %p299
      %p301 = scmp.ne.s32.totalorder %s289, %s290
      %p302 = scmp.eq.s32.totalorder %s28, 1
      %p303 = por %p301, %p302
      %p305 = scmp.ne.s32.totalorder %s290, %s304
      %p306 = scmp.eq.s32.totalorder %s28, 0
      %p307 = por %p305, %p306
      %s308 = ssub.s32 %s22, %s29
      %p309 = scmp.eq.s32.totalorder %s308, 0
      %s311 = sadd.s32 %s310, 1
      %s312 = scalar_select %p309, %s310, %s311
      %p315 = pneg %p309
      %p316 = scmp.eq.s32.totalorder %s22, 1
      %p317 = por %p315, %p316
      %p318 = scmp.ne.s32.totalorder %s310, %s313
      %p319 = scmp.eq.s32.totalorder %s22, 0
      %p320 = por %p318, %p319
      %p321 = scmp.ne.s32.totalorder %s310, %s313
      %p322 = scmp.eq.s32.totalorder %s27, 1
      %p323 = por %p321, %p322
      %p324 = scmp.ne.s32.totalorder %s313, %s314
      %p325 = scmp.eq.s32.totalorder %s27, 0
      %p326 = por %p324, %p325
      %p327 = scmp.ne.s32.totalorder %s313, %s314
      %p328 = scmp.eq.s32.totalorder %s28, 1
      %p329 = por %p327, %p328
      %p331 = scmp.ne.s32.totalorder %s314, %s330
      %p332 = scmp.eq.s32.totalorder %s28, 0
      %p333 = por %p331, %p332
      %p334 = scmp.le.s32.totalorder 1, %s22
      %p335 = scmp.lt.s32.totalorder %s22, 3
      %p336 = pnand %p334, %p335
      %p337 = pneg %p336
      // Predicated region
      $region9: #{tpu_custom_call.1} parent=5 // pred_check
        _
      $region10: #{tpu_custom_call.1} parent=5 // pred_check_branch
        %339 = sbr.rel (%p336) target = $region12
      $region11: #{tpu_custom_call.1} parent=5 // pred_region
        %s340 = ssub.s32 %s22, 1
        // Predicated region
        $region13: #{tpu_custom_call.1} parent=11 // pred_check
          %p341 = pneg %p69
        $region14: #{tpu_custom_call.1} parent=11 // pred_check_branch
          %343 = sbr.rel (%p341) target = $region16
        $region15: #{tpu_custom_call.1} parent=11 // pred_region
          _
        $region16: #{tpu_custom_call.1} parent=11 // pred_fallthru
          _
        // Predicated region
        $region17: #{tpu_custom_call.1} parent=11 // pred_check
          %p344 = pneg %p90
        $region18: #{tpu_custom_call.1} parent=11 // pred_check_branch
          %346 = sbr.rel (%p344) target = $region20
        $region19: #{tpu_custom_call.1} parent=11 // pred_region
          _
        $region20: #{tpu_custom_call.1} parent=11 // pred_fallthru
          _
        // Predicated region
        $region21: #{tpu_custom_call.1} parent=11 // pred_check
          %p347 = pneg %p111
        $region22: #{tpu_custom_call.1} parent=11 // pred_check_branch
          %349 = sbr.rel (%p347) target = $region24
        $region23: #{tpu_custom_call.1} parent=11 // pred_region
          _
        $region24: #{tpu_custom_call.1} parent=11 // pred_fallthru
          _
        // Predicated region
        $region25: #{tpu_custom_call.1} parent=11 // pred_check
          %p350 = pneg %p132
        $region26: #{tpu_custom_call.1} parent=11 // pred_check_branch
          %352 = sbr.rel (%p350) target = $region28
        $region27: #{tpu_custom_call.1} parent=11 // pred_region
          _
        $region28: #{tpu_custom_call.1} parent=11 // pred_fallthru
          _
        // Predicated region
        $region29: #{tpu_custom_call.1} parent=11 // pred_check
          %p353 = pneg %p153
        $region30: #{tpu_custom_call.1} parent=11 // pred_check_branch
          %355 = sbr.rel (%p353) target = $region32
        $region31: #{tpu_custom_call.1} parent=11 // pred_region
          _
        $region32: #{tpu_custom_call.1} parent=11 // pred_fallthru
          _
        // Predicated region
        $region33: #{tpu_custom_call.1} parent=11 // pred_check
          %p356 = pneg %p174
        $region34: #{tpu_custom_call.1} parent=11 // pred_check_branch
          %358 = sbr.rel (%p356) target = $region36
        $region35: #{tpu_custom_call.1} parent=11 // pred_region
          _
        $region36: #{tpu_custom_call.1} parent=11 // pred_fallthru
          _
        // Predicated region
        $region37: #{tpu_custom_call.1} parent=11 // pred_check
          %p359 = pneg %p195
        $region38: #{tpu_custom_call.1} parent=11 // pred_check_branch
          %361 = sbr.rel (%p359) target = $region40
        $region39: #{tpu_custom_call.1} parent=11 // pred_region
          _
        $region40: #{tpu_custom_call.1} parent=11 // pred_fallthru
          _
        // Predicated region
        $region41: #{tpu_custom_call.1} parent=11 // pred_check
          %p362 = pneg %p216
        $region42: #{tpu_custom_call.1} parent=11 // pred_check_branch
          %364 = sbr.rel (%p362) target = $region44
        $region43: #{tpu_custom_call.1} parent=11 // pred_region
          _
        $region44: #{tpu_custom_call.1} parent=11 // pred_fallthru
          _
        // Predicated region
        $region45: #{tpu_custom_call.1} parent=11 // pred_check
          %p365 = pneg %p237
        $region46: #{tpu_custom_call.1} parent=11 // pred_check_branch
          %367 = sbr.rel (%p365) target = $region48
        $region47: #{tpu_custom_call.1} parent=11 // pred_region
          _
        $region48: #{tpu_custom_call.1} parent=11 // pred_fallthru
          _
        // Predicated region
        $region49: #{tpu_custom_call.1} parent=11 // pred_check
          %p368 = pneg %p258
        $region50: #{tpu_custom_call.1} parent=11 // pred_check_branch
          %370 = sbr.rel (%p368) target = $region52
        $region51: #{tpu_custom_call.1} parent=11 // pred_region
          _
        $region52: #{tpu_custom_call.1} parent=11 // pred_fallthru
          _
        // Predicated region
        $region53: #{tpu_custom_call.1} parent=11 // pred_check
          %p371 = pneg %p279
        $region54: #{tpu_custom_call.1} parent=11 // pred_check_branch
          %373 = sbr.rel (%p371) target = $region56
        $region55: #{tpu_custom_call.1} parent=11 // pred_region
          _
        $region56: #{tpu_custom_call.1} parent=11 // pred_fallthru
          _
        // Predicated region
        $region57: #{tpu_custom_call.1} parent=11 // pred_check
          %p374 = pneg %p300
        $region58: #{tpu_custom_call.1} parent=11 // pred_check_branch
          %376 = sbr.rel (%p374) target = $region60
        $region59: #{tpu_custom_call.1} parent=11 // pred_region
          _
        $region60: #{tpu_custom_call.1} parent=11 // pred_fallthru
          _
      $region12: #{tpu_custom_call.1} parent=5 // pred_fallthru
        _
      %p377 = scmp.lt.s32.totalorder %s22, 2
      // Predicated region
      $region61: #{tpu_custom_call.1} parent=5 // pred_check
        %p378 = pneg %p377
      $region62: #{tpu_custom_call.1} parent=5 // pred_check_branch
        %380 = sbr.rel (%p378) target = $region64
      $region63: #{tpu_custom_call.1} parent=5 // pred_region
        // Predicated region
        $region65: #{tpu_custom_call.1} parent=63 // pred_check
          %p381 = pneg %p42
        $region66: #{tpu_custom_call.1} parent=63 // pred_check_branch
          %383 = sbr.rel (%p381) target = $region68
        $region67: #{tpu_custom_call.1} parent=63 // pred_region
          %p384 = scmp.lt.s32.totalorder %s22, 1
          %s385 = scalar_select %p384, %s22, 1
          %s386 = smul.addr %s385, 8
          %s387 = scalar_lea.vmem %s0, %s386
        $region68: #{tpu_custom_call.1} parent=63 // pred_fallthru
          _
      $region64: #{tpu_custom_call.1} parent=5 // pred_fallthru
        _
      %p388 = scmp.le.s32.totalorder 1, %s22
      %p389 = scmp.lt.s32.totalorder %s22, 3
      %p390 = pnand %p388, %p389
      %p391 = pneg %p390
      // Predicated region
      $region69: #{tpu_custom_call.1} parent=5 // pred_check
        _
      $region70: #{tpu_custom_call.1} parent=5 // pred_check_branch
        %393 = sbr.rel (%p390) target = $region72
      $region71: #{tpu_custom_call.1} parent=5 // pred_region
        %s394 = ssub.s32 %s22, 1
        %p395 = scmp.lt.s32.totalorder %s27, 1
        %s396 = scalar_select %p395, %s27, 1
        %s397 = smul.addr %s396, 8
        %s398 = scalar_lea.vmem %s0, %s397
        %p399 = pneg %p48
        %p400 = pneg %p45
        %p401 = pneg %p69
        %p402 = pneg %p66
        %p403 = pneg %p90
        %p404 = pneg %p87
        %p405 = pneg %p111
        %p406 = pneg %p108
        %p407 = pneg %p132
        %p408 = pneg %p129
        %p409 = pneg %p153
        %p410 = pneg %p150
        %p411 = pneg %p174
        %p412 = pneg %p171
        %p413 = pneg %p195
        %p414 = pneg %p192
        %p415 = pneg %p216
        %p416 = pneg %p213
        %p417 = pneg %p237
        %p418 = pneg %p234
        %p419 = pneg %p258
        %p420 = pneg %p255
        %p421 = pneg %p279
        %p422 = pneg %p276
        %p423 = pneg %p300
        %p424 = pneg %p297
        %p425 = pneg %p326
        %p426 = pneg %p323
        %s427 = sand.u32 %s313, 1
        %s428 = scalar_lea.sflag [#allocation4], %s427
        %s429 = sand.u32 %s313, 1
        %s430 = smul.addr %s429, 8
        %s431 = scalar_lea.vmem [#allocation3], %s430
        %p432 = scmp.lt.s32.totalorder %s27, 1
        %s433 = scalar_select %p432, %s27, 1
        %s434 = smul.addr %s433, 8
        %s435 = scalar_lea.vmem %s0, %s434
        %v436 = vld [vmem:[%s435] sm:$0xff]
        %v437 = vld [vmem:[%s1] sm:$0x1]
        %v438 = vld [vmem:[%s2] sm:$0x1]
        %vm439 = vcmask 261120
        %v440 = vsel %vm439, %v436, 0.0
        %441 = vadd.xlane.f32.xlu0 %v440
        %v442 = vpop.xlane.xlu0 %441
        %v443 = vrcp.pop 32.0
        %v444 = vmul.f32 %v442, %v443
        %v445 = vsub.f32 %v436, %v444
        %v446 = vmul.f32 %v445, %v445
        %v447 = vsel %vm439, %v446, 0.0
        %448 = vadd.xlane.f32.xlu0 %v447
        %v449 = vpop.xlane.xlu0 %448
        %v450 = vmul.f32 %v449, %v443
        %v451 = vadd.f32 %v450, 1e-05
        %v452 = vrsqrt.pop %v451
        %v453 = vmul.f32 %v445, %v452
        %v455 = vlaneseq
        %v456 = vshrl.u32 %v455, 7
        %v457 = vsub.s32 0, %v456
        %v458 = vrot.slane %v437, %v457
        %v460 = vmul.f32 %v453, %v458
        %v462 = vlaneseq
        %v463 = vshrl.u32 %v462, 7
        %v464 = vsub.s32 0, %v463
        %v465 = vrot.slane %v438, %v464
        %v467 = vadd.f32 %v460, %v465
        %v468 = vld [vmem:[%s3] sm:$0xff]
        %v469 = vld [vmem:[%s3 + $0x8] sm:$0xff]
        %v470 = vld [vmem:[%s3 + $0x10] sm:$0xff]
        %v471 = vld [vmem:[%s3 + $0x18] sm:$0xff]
        %v472 = vld [vmem:[%s4] sm:$0x1]
        %v474 = vlaneseq
        %v475 = vshrl.u32 %v474, 7
        %v476 = vsub.s32 0, %v475
        %v477 = vrot.slane %v472, %v476
        %v480 = vsel %vm439, %v467, 0
        %482 = vmatprep.subr.mxu0 0.0
        %483 = vmatpush1.msra.mxu0 0.0
        %484 = vmatprep.subr.mxu0 0.0
        %485 = vmatpush1.msra.mxu0 0.0
        %486 = vmatprep.subr.mxu0 0.0
        %487 = vmatpush1.msra.mxu0 0.0
        %488 = vmatprep.subr.mxu0 0.0
        %489 = vmatpush1.msra.mxu0 0.0
        %490 = vmatprep.subr.mxu0 0.0
        %491 = vmatpush1.msra.mxu0 0.0
        %492 = vmatprep.subr.mxu0 0.0
        %493 = vmatpush1.msra.mxu0 0.0
        %494 = vmatprep.subr.mxu0 0.0
        %495 = vmatpush1.msra.mxu0 0.0
        %496 = vmatprep.subr.mxu0 0.0
        %497 = vmatpush1.msra.mxu0 0.0
        %498 = vmatprep.subr.mxu0 0.0
        %499 = vmatpush1.msra.mxu0 0.0
        %500 = vmatprep.subr.mxu0 0.0
        %501 = vmatpush1.msra.mxu0 0.0
        %502 = vmatprep.subr.mxu0 0.0
        %503 = vmatpush1.msra.mxu0 0.0
        %504 = vmatprep.subr.mxu0 0.0
        %505 = vmatpush1.msra.mxu0 0.0
        %506 = vmatprep.subr.mxu0 0.0
        %507 = vmatpush1.msra.mxu0 %v471
        %508 = vmatprep.subr.mxu0 0.0
        %509 = vmatpush1.msra.mxu0 %v470
        %510 = vmatprep.subr.mxu0 0.0
        %511 = vmatpush1.msra.mxu0 %v469
        %512 = vmatprep.subr.mxu0 0.0
        %513 = vmatpush1.msra.mxu0 %v468
        %514 = vmatprep.subr.mxu0 0.0
        %515 = vmatpush2.msra.mxu0 0.0
        %516 = vmatprep.subr.mxu0 0.0
        %517 = vmatpush2.msra.mxu0 0.0
        %518 = vmatprep.subr.mxu0 0.0
        %519 = vmatpush2.msra.mxu0 0.0
        %520 = vmatprep.subr.mxu0 0.0
        %521 = vmatpush2.msra.mxu0 0.0
        %522 = vmatprep.subr.mxu0 0.0
        %523 = vmatpush2.msra.mxu0 0.0
        %524 = vmatprep.subr.mxu0 0.0
        %525 = vmatpush2.msra.mxu0 0.0
        %526 = vmatprep.subr.mxu0 0.0
        %527 = vmatpush2.msra.mxu0 0.0
        %528 = vmatprep.subr.mxu0 0.0
        %529 = vmatpush2.msra.mxu0 0.0
        %530 = vmatprep.subr.mxu0 0.0
        %531 = vmatpush2.msra.mxu0 0.0
        %532 = vmatprep.subr.mxu0 0.0
        %533 = vmatpush2.msra.mxu0 0.0
        %534 = vmatprep.subr.mxu0 0.0
        %535 = vmatpush2.msra.mxu0 0.0
        %536 = vmatprep.subr.mxu0 0.0
        %537 = vmatpush2.msra.mxu0 0.0
        %538 = vmatprep.subr.mxu0 0.0
        %539 = vmatpush2.msra.mxu0 0.0
        %540 = vmatprep.subr.mxu0 0.0
        %541 = vmatpush2.msra.mxu0 0.0
        %542 = vmatprep.subr.mxu0 0.0
        %543 = vmatpush2.msra.mxu0 0.0
        %544 = vmatprep.subr.mxu0 0.0
        %545 = vmatpush2.msra.mxu0 0.0
        %546 = vmatprep.mubr.f32.mxu0 0.0
        %547 = vmatmul.mubr.f32.gmra.mxu0 %v480
        %v548 = vpop.f32.mrf.mxu0
        %v549 = vadd.f32 %v477, %v548
        %v550 = vpop.f32.mrf.mxu0
        %551 = vdwg.mxu0
        %553 = vrot.lane.b32.xlu0 %v549, 96
        %v554 = vpop.permute.xlu0 %553
        %vm555 = vcmask 64512
        %v556 = vsel %vm555, %v549, 0
        %v558 = vsel %vm555, %v554, 0
        %560 = vmatprep.subr.mxu0 0.0
        %561 = vmatpush1.xpose.msra.mxu0 0.0
        %562 = vmatprep.subr.mxu0 0.0
        %563 = vmatpush1.xpose.msra.mxu0 0.0
        %564 = vmatprep.subr.mxu0 0.0
        %565 = vmatpush1.xpose.msra.mxu0 0.0
        %566 = vmatprep.subr.mxu0 0.0
        %567 = vmatpush1.xpose.msra.mxu0 0.0
        %568 = vmatprep.subr.mxu0 0.0
        %569 = vmatpush1.xpose.msra.mxu0 0.0
        %570 = vmatprep.subr.mxu0 0.0
        %571 = vmatpush1.xpose.msra.mxu0 0.0
        %572 = vmatprep.subr.mxu0 0.0
        %573 = vmatpush1.xpose.msra.mxu0 0.0
        %574 = vmatprep.subr.mxu0 0.0
        %575 = vmatpush1.xpose.msra.mxu0 0.0
        %576 = vmatprep.subr.mxu0 0.0
        %577 = vmatpush1.xpose.msra.mxu0 0.0
        %578 = vmatprep.subr.mxu0 0.0
        %579 = vmatpush1.xpose.msra.mxu0 0.0
        %580 = vmatprep.subr.mxu0 0.0
        %581 = vmatpush1.xpose.msra.mxu0 0.0
        %582 = vmatprep.subr.mxu0 0.0
        %583 = vmatpush1.xpose.msra.mxu0 0.0
        %584 = vmatprep.subr.mxu0 0.0
        %585 = vmatpush1.xpose.msra.mxu0 0.0
        %586 = vmatprep.subr.mxu0 0.0
        %587 = vmatpush1.xpose.msra.mxu0 0.0
        %588 = vmatprep.subr.mxu0 0.0
        %589 = vmatpush1.xpose.msra.mxu0 0.0
        %590 = vmatprep.subr.mxu0 0.0
        %591 = vmatpush1.xpose.msra.mxu0 %v558
        %592 = vmatprep.subr.mxu0 0.0
        %593 = vmatpush2.xpose.msra.mxu0 0.0
        %594 = vmatprep.subr.mxu0 0.0
        %595 = vmatpush2.xpose.msra.mxu0 0.0
        %596 = vmatprep.subr.mxu0 0.0
        %597 = vmatpush2.xpose.msra.mxu0 0.0
        %598 = vmatprep.subr.mxu0 0.0
        %599 = vmatpush2.xpose.msra.mxu0 0.0
        %600 = vmatprep.subr.mxu0 0.0
        %601 = vmatpush2.xpose.msra.mxu0 0.0
        %602 = vmatprep.subr.mxu0 0.0
        %603 = vmatpush2.xpose.msra.mxu0 0.0
        %604 = vmatprep.subr.mxu0 0.0
        %605 = vmatpush2.xpose.msra.mxu0 0.0
        %606 = vmatprep.subr.mxu0 0.0
        %607 = vmatpush2.xpose.msra.mxu0 0.0
        %608 = vmatprep.subr.mxu0 0.0
        %609 = vmatpush2.xpose.msra.mxu0 0.0
        %610 = vmatprep.subr.mxu0 0.0
        %611 = vmatpush2.xpose.msra.mxu0 0.0
        %612 = vmatprep.subr.mxu0 0.0
        %613 = vmatpush2.xpose.msra.mxu0 0.0
        %614 = vmatprep.subr.mxu0 0.0
        %615 = vmatpush2.xpose.msra.mxu0 0.0
        %616 = vmatprep.subr.mxu0 0.0
        %617 = vmatpush2.xpose.msra.mxu0 0.0
        %618 = vmatprep.subr.mxu0 0.0
        %619 = vmatpush2.xpose.msra.mxu0 0.0
        %620 = vmatprep.subr.mxu0 0.0
        %621 = vmatpush2.xpose.msra.mxu0 0.0
        %622 = vmatprep.subr.mxu0 0.0
        %623 = vmatpush2.xpose.msra.mxu0 0.0
        %624 = vmatprep.mubr.f32.mxu0 0.0
        %625 = vmatmul.mubr.f32.gmra.mxu0 %v556
        %v626 = vpop.f32.mrf.mxu0
        %v627 = vadd.f32 0.0, %v626
        %v628 = vpop.f32.mrf.mxu0
        %629 = vdwg.mxu0
        %v630 = vsel %vm555, %v627, -inf
        %631 = vmax.xlane.f32.xlu0 %v630
        %v632 = vpop.xlane.xlu0 %631
        %v633 = vsub.f32 %v627, %v632
        %v634 = vmul.f32 %v633, 1.442695
        %v635 = vpow.pop %v634
        %v636 = vsel %vm555, %v635, 0.0
        %637 = vadd.xlane.f32.xlu0 %v636
        %v638 = vpop.xlane.xlu0 %637
        %639 = vrot.lane.b32.xlu0 %v549, 64
        %v640 = vpop.permute.xlu0 %639
        %v643 = vsel %vm555, %v635, 0
        %645 = vmatprep.subr.mxu0 0.0
        %646 = vmatpush1.msra.mxu0 0.0
        %647 = vmatprep.subr.mxu0 0.0
        %648 = vmatpush1.msra.mxu0 0.0
        %649 = vmatprep.subr.mxu0 0.0
        %650 = vmatpush1.msra.mxu0 0.0
        %651 = vmatprep.subr.mxu0 0.0
        %652 = vmatpush1.msra.mxu0 0.0
        %653 = vmatprep.subr.mxu0 0.0
        %654 = vmatpush1.msra.mxu0 0.0
        %655 = vmatprep.subr.mxu0 0.0
        %656 = vmatpush1.msra.mxu0 0.0
        %657 = vmatprep.subr.mxu0 0.0
        %658 = vmatpush1.msra.mxu0 0.0
        %659 = vmatprep.subr.mxu0 0.0
        %660 = vmatpush1.msra.mxu0 0.0
        %661 = vmatprep.subr.mxu0 0.0
        %662 = vmatpush1.msra.mxu0 0.0
        %663 = vmatprep.subr.mxu0 0.0
        %664 = vmatpush1.msra.mxu0 0.0
        %665 = vmatprep.subr.mxu0 0.0
        %666 = vmatpush1.msra.mxu0 0.0
        %667 = vmatprep.subr.mxu0 0.0
        %668 = vmatpush1.msra.mxu0 0.0
        %669 = vmatprep.subr.mxu0 0.0
        %670 = vmatpush1.msra.mxu0 0.0
        %671 = vmatprep.subr.mxu0 0.0
        %672 = vmatpush1.msra.mxu0 0.0
        %673 = vmatprep.subr.mxu0 0.0
        %674 = vmatpush1.msra.mxu0 0.0
        %675 = vmatprep.subr.mxu0 0.0
        %676 = vmatpush1.msra.mxu0 %v640
        %677 = vmatprep.subr.mxu0 0.0
        %678 = vmatpush2.msra.mxu0 0.0
        %679 = vmatprep.subr.mxu0 0.0
        %680 = vmatpush2.msra.mxu0 0.0
        %681 = vmatprep.subr.mxu0 0.0
        %682 = vmatpush2.msra.mxu0 0.0
        %683 = vmatprep.subr.mxu0 0.0
        %684 = vmatpush2.msra.mxu0 0.0
        %685 = vmatprep.subr.mxu0 0.0
        %686 = vmatpush2.msra.mxu0 0.0
        %687 = vmatprep.subr.mxu0 0.0
        %688 = vmatpush2.msra.mxu0 0.0
        %689 = vmatprep.subr.mxu0 0.0
        %690 = vmatpush2.msra.mxu0 0.0
        %691 = vmatprep.subr.mxu0 0.0
        %692 = vmatpush2.msra.mxu0 0.0
        %693 = vmatprep.subr.mxu0 0.0
        %694 = vmatpush2.msra.mxu0 0.0
        %695 = vmatprep.subr.mxu0 0.0
        %696 = vmatpush2.msra.mxu0 0.0
        %697 = vmatprep.subr.mxu0 0.0
        %698 = vmatpush2.msra.mxu0 0.0
        %699 = vmatprep.subr.mxu0 0.0
        %700 = vmatpush2.msra.mxu0 0.0
        %701 = vmatprep.subr.mxu0 0.0
        %702 = vmatpush2.msra.mxu0 0.0
        %703 = vmatprep.subr.mxu0 0.0
        %704 = vmatpush2.msra.mxu0 0.0
        %705 = vmatprep.subr.mxu0 0.0
        %706 = vmatpush2.msra.mxu0 0.0
        %707 = vmatprep.subr.mxu0 0.0
        %708 = vmatpush2.msra.mxu0 0.0
        %709 = vmatprep.mubr.f32.mxu0 0.0
        %710 = vmatmul.mubr.f32.gmra.mxu0 %v643
        %v711 = vpop.f32.mrf.mxu0
        %v712 = vadd.f32 0.0, %v711
        %v713 = vpop.f32.mrf.mxu0
        %714 = vdwg.mxu0
        %v715 = vrcp.pop %v638
        %v716 = vmul.f32 %v712, %v715
        %717 = vst.msk [vmem:[#allocation2] sm:$0xff] %vm555, %v716
        %718 = vrot.lane.b32.xlu0 %v549, 120
        %v719 = vpop.permute.xlu0 %718
        %720 = vrot.lane.b32.xlu0 %v549, 88
        %v721 = vpop.permute.xlu0 %720
        %v722 = vsel %vm555, %v719, 0
        %v724 = vsel %vm555, %v721, 0
        %726 = vmatprep.subr.mxu0 0.0
        %727 = vmatpush1.xpose.msra.mxu0 0.0
        %728 = vmatprep.subr.mxu0 0.0
        %729 = vmatpush1.xpose.msra.mxu0 0.0
        %730 = vmatprep.subr.mxu0 0.0
        %731 = vmatpush1.xpose.msra.mxu0 0.0
        %732 = vmatprep.subr.mxu0 0.0
        %733 = vmatpush1.xpose.msra.mxu0 0.0
        %734 = vmatprep.subr.mxu0 0.0
        %735 = vmatpush1.xpose.msra.mxu0 0.0
        %736 = vmatprep.subr.mxu0 0.0
        %737 = vmatpush1.xpose.msra.mxu0 0.0
        %738 = vmatprep.subr.mxu0 0.0
        %739 = vmatpush1.xpose.msra.mxu0 0.0
        %740 = vmatprep.subr.mxu0 0.0
        %741 = vmatpush1.xpose.msra.mxu0 0.0
        %742 = vmatprep.subr.mxu0 0.0
        %743 = vmatpush1.xpose.msra.mxu0 0.0
        %744 = vmatprep.subr.mxu0 0.0
        %745 = vmatpush1.xpose.msra.mxu0 0.0
        %746 = vmatprep.subr.mxu0 0.0
        %747 = vmatpush1.xpose.msra.mxu0 0.0
        %748 = vmatprep.subr.mxu0 0.0
        %749 = vmatpush1.xpose.msra.mxu0 0.0
        %750 = vmatprep.subr.mxu0 0.0
        %751 = vmatpush1.xpose.msra.mxu0 0.0
        %752 = vmatprep.subr.mxu0 0.0
        %753 = vmatpush1.xpose.msra.mxu0 0.0
        %754 = vmatprep.subr.mxu0 0.0
        %755 = vmatpush1.xpose.msra.mxu0 0.0
        %756 = vmatprep.subr.mxu0 0.0
        %757 = vmatpush1.xpose.msra.mxu0 %v724
        %758 = vmatprep.subr.mxu0 0.0
        %759 = vmatpush2.xpose.msra.mxu0 0.0
        %760 = vmatprep.subr.mxu0 0.0
        %761 = vmatpush2.xpose.msra.mxu0 0.0
        %762 = vmatprep.subr.mxu0 0.0
        %763 = vmatpush2.xpose.msra.mxu0 0.0
        %764 = vmatprep.subr.mxu0 0.0
        %765 = vmatpush2.xpose.msra.mxu0 0.0
        %766 = vmatprep.subr.mxu0 0.0
        %767 = vmatpush2.xpose.msra.mxu0 0.0
        %768 = vmatprep.subr.mxu0 0.0
        %769 = vmatpush2.xpose.msra.mxu0 0.0
        %770 = vmatprep.subr.mxu0 0.0
        %771 = vmatpush2.xpose.msra.mxu0 0.0
        %772 = vmatprep.subr.mxu0 0.0
        %773 = vmatpush2.xpose.msra.mxu0 0.0
        %774 = vmatprep.subr.mxu0 0.0
        %775 = vmatpush2.xpose.msra.mxu0 0.0
        %776 = vmatprep.subr.mxu0 0.0
        %777 = vmatpush2.xpose.msra.mxu0 0.0
        %778 = vmatprep.subr.mxu0 0.0
        %779 = vmatpush2.xpose.msra.mxu0 0.0
        %780 = vmatprep.subr.mxu0 0.0
        %781 = vmatpush2.xpose.msra.mxu0 0.0
        %782 = vmatprep.subr.mxu0 0.0
        %783 = vmatpush2.xpose.msra.mxu0 0.0
        %784 = vmatprep.subr.mxu0 0.0
        %785 = vmatpush2.xpose.msra.mxu0 0.0
        %786 = vmatprep.subr.mxu0 0.0
        %787 = vmatpush2.xpose.msra.mxu0 0.0
        %788 = vmatprep.subr.mxu0 0.0
        %789 = vmatpush2.xpose.msra.mxu0 0.0
        %790 = vmatprep.mubr.f32.mxu0 0.0
        %791 = vmatmul.mubr.f32.gmra.mxu0 %v722
        %v792 = vpop.f32.mrf.mxu0
        %v793 = vadd.f32 0.0, %v792
        %v794 = vpop.f32.mrf.mxu0
        %795 = vdwg.mxu0
        %v796 = vsel %vm555, %v793, -inf
        %797 = vmax.xlane.f32.xlu0 %v796
        %v798 = vpop.xlane.xlu0 %797
        %v799 = vsub.f32 %v793, %v798
        %v800 = vmul.f32 %v799, 1.442695
        %v801 = vpow.pop %v800
        %v802 = vsel %vm555, %v801, 0.0
        %803 = vadd.xlane.f32.xlu0 %v802
        %v804 = vpop.xlane.xlu0 %803
        %805 = vrot.lane.b32.xlu0 %v549, 56
        %v806 = vpop.permute.xlu0 %805
        %v809 = vsel %vm555, %v801, 0
        %811 = vmatprep.subr.mxu0 0.0
        %812 = vmatpush1.msra.mxu0 0.0
        %813 = vmatprep.subr.mxu0 0.0
        %814 = vmatpush1.msra.mxu0 0.0
        %815 = vmatprep.subr.mxu0 0.0
        %816 = vmatpush1.msra.mxu0 0.0
        %817 = vmatprep.subr.mxu0 0.0
        %818 = vmatpush1.msra.mxu0 0.0
        %819 = vmatprep.subr.mxu0 0.0
        %820 = vmatpush1.msra.mxu0 0.0
        %821 = vmatprep.subr.mxu0 0.0
        %822 = vmatpush1.msra.mxu0 0.0
        %823 = vmatprep.subr.mxu0 0.0
        %824 = vmatpush1.msra.mxu0 0.0
        %825 = vmatprep.subr.mxu0 0.0
        %826 = vmatpush1.msra.mxu0 0.0
        %827 = vmatprep.subr.mxu0 0.0
        %828 = vmatpush1.msra.mxu0 0.0
        %829 = vmatprep.subr.mxu0 0.0
        %830 = vmatpush1.msra.mxu0 0.0
        %831 = vmatprep.subr.mxu0 0.0
        %832 = vmatpush1.msra.mxu0 0.0
        %833 = vmatprep.subr.mxu0 0.0
        %834 = vmatpush1.msra.mxu0 0.0
        %835 = vmatprep.subr.mxu0 0.0
        %836 = vmatpush1.msra.mxu0 0.0
        %837 = vmatprep.subr.mxu0 0.0
        %838 = vmatpush1.msra.mxu0 0.0
        %839 = vmatprep.subr.mxu0 0.0
        %840 = vmatpush1.msra.mxu0 0.0
        %841 = vmatprep.subr.mxu0 0.0
        %842 = vmatpush1.msra.mxu0 %v806
        %843 = vmatprep.subr.mxu0 0.0
        %844 = vmatpush2.msra.mxu0 0.0
        %845 = vmatprep.subr.mxu0 0.0
        %846 = vmatpush2.msra.mxu0 0.0
        %847 = vmatprep.subr.mxu0 0.0
        %848 = vmatpush2.msra.mxu0 0.0
        %849 = vmatprep.subr.mxu0 0.0
        %850 = vmatpush2.msra.mxu0 0.0
        %851 = vmatprep.subr.mxu0 0.0
        %852 = vmatpush2.msra.mxu0 0.0
        %853 = vmatprep.subr.mxu0 0.0
        %854 = vmatpush2.msra.mxu0 0.0
        %855 = vmatprep.subr.mxu0 0.0
        %856 = vmatpush2.msra.mxu0 0.0
        %857 = vmatprep.subr.mxu0 0.0
        %858 = vmatpush2.msra.mxu0 0.0
        %859 = vmatprep.subr.mxu0 0.0
        %860 = vmatpush2.msra.mxu0 0.0
        %861 = vmatprep.subr.mxu0 0.0
        %862 = vmatpush2.msra.mxu0 0.0
        %863 = vmatprep.subr.mxu0 0.0
        %864 = vmatpush2.msra.mxu0 0.0
        %865 = vmatprep.subr.mxu0 0.0
        %866 = vmatpush2.msra.mxu0 0.0
        %867 = vmatprep.subr.mxu0 0.0
        %868 = vmatpush2.msra.mxu0 0.0
        %869 = vmatprep.subr.mxu0 0.0
        %870 = vmatpush2.msra.mxu0 0.0
        %871 = vmatprep.subr.mxu0 0.0
        %872 = vmatpush2.msra.mxu0 0.0
        %873 = vmatprep.subr.mxu0 0.0
        %874 = vmatpush2.msra.mxu0 0.0
        %875 = vmatprep.mubr.f32.mxu0 0.0
        %876 = vmatmul.mubr.f32.gmra.mxu0 %v809
        %v877 = vpop.f32.mrf.mxu0
        %v878 = vadd.f32 0.0, %v877
        %v879 = vpop.f32.mrf.mxu0
        %880 = vdwg.mxu0
        %v881 = vrcp.pop %v804
        %v882 = vmul.f32 %v878, %v881
        %884 = vrot.lane.b32.xlu0 %v882, 8
        %v885 = vpop.permute.xlu0 %884
        %vm887 = vcmask 130112
        %888 = vst.msk [vmem:[#allocation2] sm:$0xff] %vm887, %v885
        %889 = vrot.lane.b32.xlu0 %v549, 112
        %v890 = vpop.permute.xlu0 %889
        %891 = vrot.lane.b32.xlu0 %v549, 80
        %v892 = vpop.permute.xlu0 %891
        %v893 = vsel %vm555, %v890, 0
        %v895 = vsel %vm555, %v892, 0
        %897 = vmatprep.subr.mxu0 0.0
        %898 = vmatpush1.xpose.msra.mxu0 0.0
        %899 = vmatprep.subr.mxu0 0.0
        %900 = vmatpush1.xpose.msra.mxu0 0.0
        %901 = vmatprep.subr.mxu0 0.0
        %902 = vmatpush1.xpose.msra.mxu0 0.0
        %903 = vmatprep.subr.mxu0 0.0
        %904 = vmatpush1.xpose.msra.mxu0 0.0
        %905 = vmatprep.subr.mxu0 0.0
        %906 = vmatpush1.xpose.msra.mxu0 0.0
        %907 = vmatprep.subr.mxu0 0.0
        %908 = vmatpush1.xpose.msra.mxu0 0.0
        %909 = vmatprep.subr.mxu0 0.0
        %910 = vmatpush1.xpose.msra.mxu0 0.0
        %911 = vmatprep.subr.mxu0 0.0
        %912 = vmatpush1.xpose.msra.mxu0 0.0
        %913 = vmatprep.subr.mxu0 0.0
        %914 = vmatpush1.xpose.msra.mxu0 0.0
        %915 = vmatprep.subr.mxu0 0.0
        %916 = vmatpush1.xpose.msra.mxu0 0.0
        %917 = vmatprep.subr.mxu0 0.0
        %918 = vmatpush1.xpose.msra.mxu0 0.0
        %919 = vmatprep.subr.mxu0 0.0
        %920 = vmatpush1.xpose.msra.mxu0 0.0
        %921 = vmatprep.subr.mxu0 0.0
        %922 = vmatpush1.xpose.msra.mxu0 0.0
        %923 = vmatprep.subr.mxu0 0.0
        %924 = vmatpush1.xpose.msra.mxu0 0.0
        %925 = vmatprep.subr.mxu0 0.0
        %926 = vmatpush1.xpose.msra.mxu0 0.0
        %927 = vmatprep.subr.mxu0 0.0
        %928 = vmatpush1.xpose.msra.mxu0 %v895
        %929 = vmatprep.subr.mxu0 0.0
        %930 = vmatpush2.xpose.msra.mxu0 0.0
        %931 = vmatprep.subr.mxu0 0.0
        %932 = vmatpush2.xpose.msra.mxu0 0.0
        %933 = vmatprep.subr.mxu0 0.0
        %934 = vmatpush2.xpose.msra.mxu0 0.0
        %935 = vmatprep.subr.mxu0 0.0
        %936 = vmatpush2.xpose.msra.mxu0 0.0
        %937 = vmatprep.subr.mxu0 0.0
        %938 = vmatpush2.xpose.msra.mxu0 0.0
        %939 = vmatprep.subr.mxu0 0.0
        %940 = vmatpush2.xpose.msra.mxu0 0.0
        %941 = vmatprep.subr.mxu0 0.0
        %942 = vmatpush2.xpose.msra.mxu0 0.0
        %943 = vmatprep.subr.mxu0 0.0
        %944 = vmatpush2.xpose.msra.mxu0 0.0
        %945 = vmatprep.subr.mxu0 0.0
        %946 = vmatpush2.xpose.msra.mxu0 0.0
        %947 = vmatprep.subr.mxu0 0.0
        %948 = vmatpush2.xpose.msra.mxu0 0.0
        %949 = vmatprep.subr.mxu0 0.0
        %950 = vmatpush2.xpose.msra.mxu0 0.0
        %951 = vmatprep.subr.mxu0 0.0
        %952 = vmatpush2.xpose.msra.mxu0 0.0
        %953 = vmatprep.subr.mxu0 0.0
        %954 = vmatpush2.xpose.msra.mxu0 0.0
        %955 = vmatprep.subr.mxu0 0.0
        %956 = vmatpush2.xpose.msra.mxu0 0.0
        %957 = vmatprep.subr.mxu0 0.0
        %958 = vmatpush2.xpose.msra.mxu0 0.0
        %959 = vmatprep.subr.mxu0 0.0
        %960 = vmatpush2.xpose.msra.mxu0 0.0
        %961 = vmatprep.mubr.f32.mxu0 0.0
        %962 = vmatmul.mubr.f32.gmra.mxu0 %v893
        %v963 = vpop.f32.mrf.mxu0
        %v964 = vadd.f32 0.0, %v963
        %v965 = vpop.f32.mrf.mxu0
        %966 = vdwg.mxu0
        %v967 = vsel %vm555, %v964, -inf
        %968 = vmax.xlane.f32.xlu0 %v967
        %v969 = vpop.xlane.xlu0 %968
        %v970 = vsub.f32 %v964, %v969
        %v971 = vmul.f32 %v970, 1.442695
        %v972 = vpow.pop %v971
        %v973 = vsel %vm555, %v972, 0.0
        %974 = vadd.xlane.f32.xlu0 %v973
        %v975 = vpop.xlane.xlu0 %974
        %976 = vrot.lane.b32.xlu0 %v549, 48
        %v977 = vpop.permute.xlu0 %976
        %v980 = vsel %vm555, %v972, 0
        %982 = vmatprep.subr.mxu0 0.0
        %983 = vmatpush1.msra.mxu0 0.0
        %984 = vmatprep.subr.mxu0 0.0
        %985 = vmatpush1.msra.mxu0 0.0
        %986 = vmatprep.subr.mxu0 0.0
        %987 = vmatpush1.msra.mxu0 0.0
        %988 = vmatprep.subr.mxu0 0.0
        %989 = vmatpush1.msra.mxu0 0.0
        %990 = vmatprep.subr.mxu0 0.0
        %991 = vmatpush1.msra.mxu0 0.0
        %992 = vmatprep.subr.mxu0 0.0
        %993 = vmatpush1.msra.mxu0 0.0
        %994 = vmatprep.subr.mxu0 0.0
        %995 = vmatpush1.msra.mxu0 0.0
        %996 = vmatprep.subr.mxu0 0.0
        %997 = vmatpush1.msra.mxu0 0.0
        %998 = vmatprep.subr.mxu0 0.0
        %999 = vmatpush1.msra.mxu0 0.0
        %1000 = vmatprep.subr.mxu0 0.0
        %1001 = vmatpush1.msra.mxu0 0.0
        %1002 = vmatprep.subr.mxu0 0.0
        %1003 = vmatpush1.msra.mxu0 0.0
        %1004 = vmatprep.subr.mxu0 0.0
        %1005 = vmatpush1.msra.mxu0 0.0
        %1006 = vmatprep.subr.mxu0 0.0
        %1007 = vmatpush1.msra.mxu0 0.0
        %1008 = vmatprep.subr.mxu0 0.0
        %1009 = vmatpush1.msra.mxu0 0.0
        %1010 = vmatprep.subr.mxu0 0.0
        %1011 = vmatpush1.msra.mxu0 0.0
        %1012 = vmatprep.subr.mxu0 0.0
        %1013 = vmatpush1.msra.mxu0 %v977
        %1014 = vmatprep.subr.mxu0 0.0
        %1015 = vmatpush2.msra.mxu0 0.0
        %1016 = vmatprep.subr.mxu0 0.0
        %1017 = vmatpush2.msra.mxu0 0.0
        %1018 = vmatprep.subr.mxu0 0.0
        %1019 = vmatpush2.msra.mxu0 0.0
        %1020 = vmatprep.subr.mxu0 0.0
        %1021 = vmatpush2.msra.mxu0 0.0
        %1022 = vmatprep.subr.mxu0 0.0
        %1023 = vmatpush2.msra.mxu0 0.0
        %1024 = vmatprep.subr.mxu0 0.0
        %1025 = vmatpush2.msra.mxu0 0.0
        %1026 = vmatprep.subr.mxu0 0.0
        %1027 = vmatpush2.msra.mxu0 0.0
        %1028 = vmatprep.subr.mxu0 0.0
        %1029 = vmatpush2.msra.mxu0 0.0
        %1030 = vmatprep.subr.mxu0 0.0
        %1031 = vmatpush2.msra.mxu0 0.0
        %1032 = vmatprep.subr.mxu0 0.0
        %1033 = vmatpush2.msra.mxu0 0.0
        %1034 = vmatprep.subr.mxu0 0.0
        %1035 = vmatpush2.msra.mxu0 0.0
        %1036 = vmatprep.subr.mxu0 0.0
        %1037 = vmatpush2.msra.mxu0 0.0
        %1038 = vmatprep.subr.mxu0 0.0
        %1039 = vmatpush2.msra.mxu0 0.0
        %1040 = vmatprep.subr.mxu0 0.0
        %1041 = vmatpush2.msra.mxu0 0.0
        %1042 = vmatprep.subr.mxu0 0.0
        %1043 = vmatpush2.msra.mxu0 0.0
        %1044 = vmatprep.subr.mxu0 0.0
        %1045 = vmatpush2.msra.mxu0 0.0
        %1046 = vmatprep.mubr.f32.mxu0 0.0
        %1047 = vmatmul.mubr.f32.gmra.mxu0 %v980
        %v1048 = vpop.f32.mrf.mxu0
        %v1049 = vadd.f32 0.0, %v1048
        %v1050 = vpop.f32.mrf.mxu0
        %1051 = vdwg.mxu0
        %v1052 = vrcp.pop %v975
        %v1053 = vmul.f32 %v1049, %v1052
        %1055 = vrot.lane.b32.xlu0 %v1053, 16
        %v1056 = vpop.permute.xlu0 %1055
        %vm1058 = vcmask 195712
        %1059 = vst.msk [vmem:[#allocation2] sm:$0xff] %vm1058, %v1056
        %1060 = vrot.lane.b32.xlu0 %v549, 104
        %v1061 = vpop.permute.xlu0 %1060
        %1062 = vrot.lane.b32.xlu0 %v549, 72
        %v1063 = vpop.permute.xlu0 %1062
        %v1064 = vsel %vm555, %v1061, 0
        %v1066 = vsel %vm555, %v1063, 0
        %1068 = vmatprep.subr.mxu0 0.0
        %1069 = vmatpush1.xpose.msra.mxu0 0.0
        %1070 = vmatprep.subr.mxu0 0.0
        %1071 = vmatpush1.xpose.msra.mxu0 0.0
        %1072 = vmatprep.subr.mxu0 0.0
        %1073 = vmatpush1.xpose.msra.mxu0 0.0
        %1074 = vmatprep.subr.mxu0 0.0
        %1075 = vmatpush1.xpose.msra.mxu0 0.0
        %1076 = vmatprep.subr.mxu0 0.0
        %1077 = vmatpush1.xpose.msra.mxu0 0.0
        %1078 = vmatprep.subr.mxu0 0.0
        %1079 = vmatpush1.xpose.msra.mxu0 0.0
        %1080 = vmatprep.subr.mxu0 0.0
        %1081 = vmatpush1.xpose.msra.mxu0 0.0
        %1082 = vmatprep.subr.mxu0 0.0
        %1083 = vmatpush1.xpose.msra.mxu0 0.0
        %1084 = vmatprep.subr.mxu0 0.0
        %1085 = vmatpush1.xpose.msra.mxu0 0.0
        %1086 = vmatprep.subr.mxu0 0.0
        %1087 = vmatpush1.xpose.msra.mxu0 0.0
        %1088 = vmatprep.subr.mxu0 0.0
        %1089 = vmatpush1.xpose.msra.mxu0 0.0
        %1090 = vmatprep.subr.mxu0 0.0
        %1091 = vmatpush1.xpose.msra.mxu0 0.0
        %1092 = vmatprep.subr.mxu0 0.0
        %1093 = vmatpush1.xpose.msra.mxu0 0.0
        %1094 = vmatprep.subr.mxu0 0.0
        %1095 = vmatpush1.xpose.msra.mxu0 0.0
        %1096 = vmatprep.subr.mxu0 0.0
        %1097 = vmatpush1.xpose.msra.mxu0 0.0
        %1098 = vmatprep.subr.mxu0 0.0
        %1099 = vmatpush1.xpose.msra.mxu0 %v1066
        %1100 = vmatprep.subr.mxu0 0.0
        %1101 = vmatpush2.xpose.msra.mxu0 0.0
        %1102 = vmatprep.subr.mxu0 0.0
        %1103 = vmatpush2.xpose.msra.mxu0 0.0
        %1104 = vmatprep.subr.mxu0 0.0
        %1105 = vmatpush2.xpose.msra.mxu0 0.0
        %1106 = vmatprep.subr.mxu0 0.0
        %1107 = vmatpush2.xpose.msra.mxu0 0.0
        %1108 = vmatprep.subr.mxu0 0.0
        %1109 = vmatpush2.xpose.msra.mxu0 0.0
        %1110 = vmatprep.subr.mxu0 0.0
        %1111 = vmatpush2.xpose.msra.mxu0 0.0
        %1112 = vmatprep.subr.mxu0 0.0
        %1113 = vmatpush2.xpose.msra.mxu0 0.0
        %1114 = vmatprep.subr.mxu0 0.0
        %1115 = vmatpush2.xpose.msra.mxu0 0.0
        %1116 = vmatprep.subr.mxu0 0.0
        %1117 = vmatpush2.xpose.msra.mxu0 0.0
        %1118 = vmatprep.subr.mxu0 0.0
        %1119 = vmatpush2.xpose.msra.mxu0 0.0
        %1120 = vmatprep.subr.mxu0 0.0
        %1121 = vmatpush2.xpose.msra.mxu0 0.0
        %1122 = vmatprep.subr.mxu0 0.0
        %1123 = vmatpush2.xpose.msra.mxu0 0.0
        %1124 = vmatprep.subr.mxu0 0.0
        %1125 = vmatpush2.xpose.msra.mxu0 0.0
        %1126 = vmatprep.subr.mxu0 0.0
        %1127 = vmatpush2.xpose.msra.mxu0 0.0
        %1128 = vmatprep.subr.mxu0 0.0
        %1129 = vmatpush2.xpose.msra.mxu0 0.0
        %1130 = vmatprep.subr.mxu0 0.0
        %1131 = vmatpush2.xpose.msra.mxu0 0.0
        %1132 = vmatprep.mubr.f32.mxu0 0.0
        %1133 = vmatmul.mubr.f32.gmra.mxu0 %v1064
        %v1134 = vpop.f32.mrf.mxu0
        %v1135 = vadd.f32 0.0, %v1134
        %v1136 = vpop.f32.mrf.mxu0
        %1137 = vdwg.mxu0
        %v1138 = vsel %vm555, %v1135, -inf
        %1139 = vmax.xlane.f32.xlu0 %v1138
        %v1140 = vpop.xlane.xlu0 %1139
        %v1141 = vsub.f32 %v1135, %v1140
        %v1142 = vmul.f32 %v1141, 1.442695
        %v1143 = vpow.pop %v1142
        %v1144 = vsel %vm555, %v1143, 0.0
        %1145 = vadd.xlane.f32.xlu0 %v1144
        %v1146 = vpop.xlane.xlu0 %1145
        %1147 = vrot.lane.b32.xlu0 %v549, 40
        %v1148 = vpop.permute.xlu0 %1147
        %v1151 = vsel %vm555, %v1143, 0
        %1153 = vmatprep.subr.mxu0 0.0
        %1154 = vmatpush1.msra.mxu0 0.0
        %1155 = vmatprep.subr.mxu0 0.0
        %1156 = vmatpush1.msra.mxu0 0.0
        %1157 = vmatprep.subr.mxu0 0.0
        %1158 = vmatpush1.msra.mxu0 0.0
        %1159 = vmatprep.subr.mxu0 0.0
        %1160 = vmatpush1.msra.mxu0 0.0
        %1161 = vmatprep.subr.mxu0 0.0
        %1162 = vmatpush1.msra.mxu0 0.0
        %1163 = vmatprep.subr.mxu0 0.0
        %1164 = vmatpush1.msra.mxu0 0.0
        %1165 = vmatprep.subr.mxu0 0.0
        %1166 = vmatpush1.msra.mxu0 0.0
        %1167 = vmatprep.subr.mxu0 0.0
        %1168 = vmatpush1.msra.mxu0 0.0
        %1169 = vmatprep.subr.mxu0 0.0
        %1170 = vmatpush1.msra.mxu0 0.0
        %1171 = vmatprep.subr.mxu0 0.0
        %1172 = vmatpush1.msra.mxu0 0.0
        %1173 = vmatprep.subr.mxu0 0.0
        %1174 = vmatpush1.msra.mxu0 0.0
        %1175 = vmatprep.subr.mxu0 0.0
        %1176 = vmatpush1.msra.mxu0 0.0
        %1177 = vmatprep.subr.mxu0 0.0
        %1178 = vmatpush1.msra.mxu0 0.0
        %1179 = vmatprep.subr.mxu0 0.0
        %1180 = vmatpush1.msra.mxu0 0.0
        %1181 = vmatprep.subr.mxu0 0.0
        %1182 = vmatpush1.msra.mxu0 0.0
        %1183 = vmatprep.subr.mxu0 0.0
        %1184 = vmatpush1.msra.mxu0 %v1148
        %1185 = vmatprep.subr.mxu0 0.0
        %1186 = vmatpush2.msra.mxu0 0.0
        %1187 = vmatprep.subr.mxu0 0.0
        %1188 = vmatpush2.msra.mxu0 0.0
        %1189 = vmatprep.subr.mxu0 0.0
        %1190 = vmatpush2.msra.mxu0 0.0
        %1191 = vmatprep.subr.mxu0 0.0
        %1192 = vmatpush2.msra.mxu0 0.0
        %1193 = vmatprep.subr.mxu0 0.0
        %1194 = vmatpush2.msra.mxu0 0.0
        %1195 = vmatprep.subr.mxu0 0.0
        %1196 = vmatpush2.msra.mxu0 0.0
        %1197 = vmatprep.subr.mxu0 0.0
        %1198 = vmatpush2.msra.mxu0 0.0
        %1199 = vmatprep.subr.mxu0 0.0
        %1200 = vmatpush2.msra.mxu0 0.0
        %1201 = vmatprep.subr.mxu0 0.0
        %1202 = vmatpush2.msra.mxu0 0.0
        %1203 = vmatprep.subr.mxu0 0.0
        %1204 = vmatpush2.msra.mxu0 0.0
        %1205 = vmatprep.subr.mxu0 0.0
        %1206 = vmatpush2.msra.mxu0 0.0
        %1207 = vmatprep.subr.mxu0 0.0
        %1208 = vmatpush2.msra.mxu0 0.0
        %1209 = vmatprep.subr.mxu0 0.0
        %1210 = vmatpush2.msra.mxu0 0.0
        %1211 = vmatprep.subr.mxu0 0.0
        %1212 = vmatpush2.msra.mxu0 0.0
        %1213 = vmatprep.subr.mxu0 0.0
        %1214 = vmatpush2.msra.mxu0 0.0
        %1215 = vmatprep.subr.mxu0 0.0
        %1216 = vmatpush2.msra.mxu0 0.0
        %1217 = vmatprep.mubr.f32.mxu0 0.0
        %1218 = vmatmul.mubr.f32.gmra.mxu0 %v1151
        %v1219 = vpop.f32.mrf.mxu0
        %v1220 = vadd.f32 0.0, %v1219
        %v1221 = vpop.f32.mrf.mxu0
        %1222 = vdwg.mxu0
        %v1223 = vrcp.pop %v1146
        %v1224 = vmul.f32 %v1220, %v1223
        %1226 = vrot.lane.b32.xlu0 %v1224, 24
        %v1227 = vpop.permute.xlu0 %1226
        %vm1229 = vcmask 261312
        %1230 = vst.msk [vmem:[#allocation2] sm:$0xff] %vm1229, %v1227
        %v1231 = vld [vmem:[#allocation2] sm:$0xff]
        %v1232 = vld [vmem:[%s5] sm:$0xff]
        %v1233 = vld [vmem:[%s5 + $0x8] sm:$0xff]
        %v1234 = vld [vmem:[%s5 + $0x10] sm:$0xff]
        %v1235 = vld [vmem:[%s5 + $0x18] sm:$0xff]
        %v1236 = vld [vmem:[%s6] sm:$0x1]
        %v1238 = vlaneseq
        %v1239 = vshrl.u32 %v1238, 7
        %v1240 = vsub.s32 0, %v1239
        %v1241 = vrot.slane %v1236, %v1240
        %v1244 = vsel %vm439, %v1231, 0
        %1246 = vmatprep.subr.mxu0 0.0
        %1247 = vmatpush1.msra.mxu0 0.0
        %1248 = vmatprep.subr.mxu0 0.0
        %1249 = vmatpush1.msra.mxu0 0.0
        %1250 = vmatprep.subr.mxu0 0.0
        %1251 = vmatpush1.msra.mxu0 0.0
        %1252 = vmatprep.subr.mxu0 0.0
        %1253 = vmatpush1.msra.mxu0 0.0
        %1254 = vmatprep.subr.mxu0 0.0
        %1255 = vmatpush1.msra.mxu0 0.0
        %1256 = vmatprep.subr.mxu0 0.0
        %1257 = vmatpush1.msra.mxu0 0.0
        %1258 = vmatprep.subr.mxu0 0.0
        %1259 = vmatpush1.msra.mxu0 0.0
        %1260 = vmatprep.subr.mxu0 0.0
        %1261 = vmatpush1.msra.mxu0 0.0
        %1262 = vmatprep.subr.mxu0 0.0
        %1263 = vmatpush1.msra.mxu0 0.0
        %1264 = vmatprep.subr.mxu0 0.0
        %1265 = vmatpush1.msra.mxu0 0.0
        %1266 = vmatprep.subr.mxu0 0.0
        %1267 = vmatpush1.msra.mxu0 0.0
        %1268 = vmatprep.subr.mxu0 0.0
        %1269 = vmatpush1.msra.mxu0 0.0
        %1270 = vmatprep.subr.mxu0 0.0
        %1271 = vmatpush1.msra.mxu0 %v1235
        %1272 = vmatprep.subr.mxu0 0.0
        %1273 = vmatpush1.msra.mxu0 %v1234
        %1274 = vmatprep.subr.mxu0 0.0
        %1275 = vmatpush1.msra.mxu0 %v1233
        %1276 = vmatprep.subr.mxu0 0.0
        %1277 = vmatpush1.msra.mxu0 %v1232
        %1278 = vmatprep.subr.mxu0 0.0
        %1279 = vmatpush2.msra.mxu0 0.0
        %1280 = vmatprep.subr.mxu0 0.0
        %1281 = vmatpush2.msra.mxu0 0.0
        %1282 = vmatprep.subr.mxu0 0.0
        %1283 = vmatpush2.msra.mxu0 0.0
        %1284 = vmatprep.subr.mxu0 0.0
        %1285 = vmatpush2.msra.mxu0 0.0
        %1286 = vmatprep.subr.mxu0 0.0
        %1287 = vmatpush2.msra.mxu0 0.0
        %1288 = vmatprep.subr.mxu0 0.0
        %1289 = vmatpush2.msra.mxu0 0.0
        %1290 = vmatprep.subr.mxu0 0.0
        %1291 = vmatpush2.msra.mxu0 0.0
        %1292 = vmatprep.subr.mxu0 0.0
        %1293 = vmatpush2.msra.mxu0 0.0
        %1294 = vmatprep.subr.mxu0 0.0
        %1295 = vmatpush2.msra.mxu0 0.0
        %1296 = vmatprep.subr.mxu0 0.0
        %1297 = vmatpush2.msra.mxu0 0.0
        %1298 = vmatprep.subr.mxu0 0.0
        %1299 = vmatpush2.msra.mxu0 0.0
        %1300 = vmatprep.subr.mxu0 0.0
        %1301 = vmatpush2.msra.mxu0 0.0
        %1302 = vmatprep.subr.mxu0 0.0
        %1303 = vmatpush2.msra.mxu0 0.0
        %1304 = vmatprep.subr.mxu0 0.0
        %1305 = vmatpush2.msra.mxu0 0.0
        %1306 = vmatprep.subr.mxu0 0.0
        %1307 = vmatpush2.msra.mxu0 0.0
        %1308 = vmatprep.subr.mxu0 0.0
        %1309 = vmatpush2.msra.mxu0 0.0
        %1310 = vmatprep.mubr.f32.mxu0 0.0
        %1311 = vmatmul.mubr.f32.gmra.mxu0 %v1244
        %v1312 = vpop.f32.mrf.mxu0
        %v1313 = vadd.f32 %v1241, %v1312
        %v1314 = vpop.f32.mrf.mxu0
        %1315 = vdwg.mxu0
        %v1316 = vadd.f32 %v436, %v1313
        %v1317 = vld [vmem:[%s7] sm:$0x1]
        %v1318 = vld [vmem:[%s8] sm:$0x1]
        %v1319 = vsel %vm439, %v1316, 0.0
        %1320 = vadd.xlane.f32.xlu0 %v1319
        %v1321 = vpop.xlane.xlu0 %1320
        %v1322 = vmul.f32 %v1321, %v443
        %v1323 = vsub.f32 %v1316, %v1322
        %v1324 = vmul.f32 %v1323, %v1323
        %v1325 = vsel %vm439, %v1324, 0.0
        %1326 = vadd.xlane.f32.xlu0 %v1325
        %v1327 = vpop.xlane.xlu0 %1326
        %v1328 = vmul.f32 %v1327, %v443
        %v1329 = vadd.f32 %v1328, 1e-05
        %v1330 = vrsqrt.pop %v1329
        %v1331 = vmul.f32 %v1323, %v1330
        %v1333 = vlaneseq
        %v1334 = vshrl.u32 %v1333, 7
        %v1335 = vsub.s32 0, %v1334
        %v1336 = vrot.slane %v1317, %v1335
        %v1338 = vmul.f32 %v1331, %v1336
        %v1340 = vlaneseq
        %v1341 = vshrl.u32 %v1340, 7
        %v1342 = vsub.s32 0, %v1341
        %v1343 = vrot.slane %v1318, %v1342
        %v1345 = vadd.f32 %v1338, %v1343
        %v1346 = vld [vmem:[%s9] sm:$0xff]
        %v1347 = vld [vmem:[%s9 + $0x8] sm:$0xff]
        %v1348 = vld [vmem:[%s9 + $0x10] sm:$0xff]
        %v1349 = vld [vmem:[%s9 + $0x18] sm:$0xff]
        %v1350 = vld [vmem:[%s10] sm:$0x1]
        %v1352 = vlaneseq
        %v1353 = vshrl.u32 %v1352, 7
        %v1354 = vsub.s32 0, %v1353
        %v1355 = vrot.slane %v1350, %v1354
        %v1358 = vsel %vm439, %v1345, 0
        %1360 = vmatprep.subr.mxu0 0.0
        %1361 = vmatpush1.msra.mxu0 0.0
        %1362 = vmatprep.subr.mxu0 0.0
        %1363 = vmatpush1.msra.mxu0 0.0
        %1364 = vmatprep.subr.mxu0 0.0
        %1365 = vmatpush1.msra.mxu0 0.0
        %1366 = vmatprep.subr.mxu0 0.0
        %1367 = vmatpush1.msra.mxu0 0.0
        %1368 = vmatprep.subr.mxu0 0.0
        %1369 = vmatpush1.msra.mxu0 0.0
        %1370 = vmatprep.subr.mxu0 0.0
        %1371 = vmatpush1.msra.mxu0 0.0
        %1372 = vmatprep.subr.mxu0 0.0
        %1373 = vmatpush1.msra.mxu0 0.0
        %1374 = vmatprep.subr.mxu0 0.0
        %1375 = vmatpush1.msra.mxu0 0.0
        %1376 = vmatprep.subr.mxu0 0.0
        %1377 = vmatpush1.msra.mxu0 0.0
        %1378 = vmatprep.subr.mxu0 0.0
        %1379 = vmatpush1.msra.mxu0 0.0
        %1380 = vmatprep.subr.mxu0 0.0
        %1381 = vmatpush1.msra.mxu0 0.0
        %1382 = vmatprep.subr.mxu0 0.0
        %1383 = vmatpush1.msra.mxu0 0.0
        %1384 = vmatprep.subr.mxu0 0.0
        %1385 = vmatpush1.msra.mxu0 %v1349
        %1386 = vmatprep.subr.mxu0 0.0
        %1387 = vmatpush1.msra.mxu0 %v1348
        %1388 = vmatprep.subr.mxu0 0.0
        %1389 = vmatpush1.msra.mxu0 %v1347
        %1390 = vmatprep.subr.mxu0 0.0
        %1391 = vmatpush1.msra.mxu0 %v1346
        %1392 = vmatprep.subr.mxu0 0.0
        %1393 = vmatpush2.msra.mxu0 0.0
        %1394 = vmatprep.subr.mxu0 0.0
        %1395 = vmatpush2.msra.mxu0 0.0
        %1396 = vmatprep.subr.mxu0 0.0
        %1397 = vmatpush2.msra.mxu0 0.0
        %1398 = vmatprep.subr.mxu0 0.0
        %1399 = vmatpush2.msra.mxu0 0.0
        %1400 = vmatprep.subr.mxu0 0.0
        %1401 = vmatpush2.msra.mxu0 0.0
        %1402 = vmatprep.subr.mxu0 0.0
        %1403 = vmatpush2.msra.mxu0 0.0
        %1404 = vmatprep.subr.mxu0 0.0
        %1405 = vmatpush2.msra.mxu0 0.0
        %1406 = vmatprep.subr.mxu0 0.0
        %1407 = vmatpush2.msra.mxu0 0.0
        %1408 = vmatprep.subr.mxu0 0.0
        %1409 = vmatpush2.msra.mxu0 0.0
        %1410 = vmatprep.subr.mxu0 0.0
        %1411 = vmatpush2.msra.mxu0 0.0
        %1412 = vmatprep.subr.mxu0 0.0
        %1413 = vmatpush2.msra.mxu0 0.0
        %1414 = vmatprep.subr.mxu0 0.0
        %1415 = vmatpush2.msra.mxu0 0.0
        %1416 = vmatprep.subr.mxu0 0.0
        %1417 = vmatpush2.msra.mxu0 0.0
        %1418 = vmatprep.subr.mxu0 0.0
        %1419 = vmatpush2.msra.mxu0 0.0
        %1420 = vmatprep.subr.mxu0 0.0
        %1421 = vmatpush2.msra.mxu0 0.0
        %1422 = vmatprep.subr.mxu0 0.0
        %1423 = vmatpush2.msra.mxu0 0.0
        %1424 = vmatprep.mubr.f32.mxu0 0.0
        %1425 = vmatmul.mubr.f32.gmra.mxu0 %v1358
        %v1426 = vpop.f32.mrf.mxu0
        %v1427 = vadd.f32 %v1355, %v1426
        %v1428 = vpop.f32.mrf.mxu0
        %1429 = vdwg.mxu0
        %v1430 = vmul.f32 %v1427, 1.702
        %v1431 = vxor.u32 %v1430, 2147483648
        %v1432 = vmul.f32 %v1431, 1.442695
        %v1433 = vpow.pop %v1432
        %v1434 = vadd.f32 %v1433, 1.0
        %v1435 = vrcp.pop %v1434
        %v1436 = vmul.f32 1.0, %v1435
        %v1437 = vmul.f32 %v1427, %v1436
        %v1438 = vld [vmem:[%s11] sm:$0xff]
        %v1439 = vld [vmem:[%s11 + $0x8] sm:$0xff]
        %v1440 = vld [vmem:[%s11 + $0x10] sm:$0xff]
        %v1441 = vld [vmem:[%s11 + $0x18] sm:$0xff]
        %v1442 = vld [vmem:[%s11 + $0x20] sm:$0xff]
        %v1443 = vld [vmem:[%s11 + $0x28] sm:$0xff]
        %v1444 = vld [vmem:[%s11 + $0x30] sm:$0xff]
        %v1445 = vld [vmem:[%s11 + $0x38] sm:$0xff]
        %v1446 = vld [vmem:[%s11 + $0x40] sm:$0xff]
        %v1447 = vld [vmem:[%s11 + $0x48] sm:$0xff]
        %v1448 = vld [vmem:[%s11 + $0x50] sm:$0xff]
        %v1449 = vld [vmem:[%s11 + $0x58] sm:$0xff]
        %v1450 = vld [vmem:[%s11 + $0x60] sm:$0xff]
        %v1451 = vld [vmem:[%s11 + $0x68] sm:$0xff]
        %v1452 = vld [vmem:[%s11 + $0x70] sm:$0xff]
        %v1453 = vld [vmem:[%s11 + $0x78] sm:$0xff]
        %v1454 = vld [vmem:[%s12] sm:$0x1]
        %v1456 = vlaneseq
        %v1457 = vshrl.u32 %v1456, 7
        %v1458 = vsub.s32 0, %v1457
        %v1459 = vrot.slane %v1454, %v1458
        %1461 = vmatprep.subr.mxu0 0.0
        %1462 = vmatpush1.msra.mxu0 %v1453
        %1463 = vmatprep.subr.mxu0 0.0
        %1464 = vmatpush1.msra.mxu0 %v1452
        %1465 = vmatprep.subr.mxu0 0.0
        %1466 = vmatpush1.msra.mxu0 %v1451
        %1467 = vmatprep.subr.mxu0 0.0
        %1468 = vmatpush1.msra.mxu0 %v1450
        %1469 = vmatprep.subr.mxu0 0.0
        %1470 = vmatpush1.msra.mxu0 %v1449
        %1471 = vmatprep.subr.mxu0 0.0
        %1472 = vmatpush1.msra.mxu0 %v1448
        %1473 = vmatprep.subr.mxu0 0.0
        %1474 = vmatpush1.msra.mxu0 %v1447
        %1475 = vmatprep.subr.mxu0 0.0
        %1476 = vmatpush1.msra.mxu0 %v1446
        %1477 = vmatprep.subr.mxu0 0.0
        %1478 = vmatpush1.msra.mxu0 %v1445
        %1479 = vmatprep.subr.mxu0 0.0
        %1480 = vmatpush1.msra.mxu0 %v1444
        %1481 = vmatprep.subr.mxu0 0.0
        %1482 = vmatpush1.msra.mxu0 %v1443
        %1483 = vmatprep.subr.mxu0 0.0
        %1484 = vmatpush1.msra.mxu0 %v1442
        %1485 = vmatprep.subr.mxu0 0.0
        %1486 = vmatpush1.msra.mxu0 %v1441
        %1487 = vmatprep.subr.mxu0 0.0
        %1488 = vmatpush1.msra.mxu0 %v1440
        %1489 = vmatprep.subr.mxu0 0.0
        %1490 = vmatpush1.msra.mxu0 %v1439
        %1491 = vmatprep.subr.mxu0 0.0
        %1492 = vmatpush1.msra.mxu0 %v1438
        %1493 = vmatprep.subr.mxu0 0.0
        %1494 = vmatpush2.msra.mxu0 0.0
        %1495 = vmatprep.subr.mxu0 0.0
        %1496 = vmatpush2.msra.mxu0 0.0
        %1497 = vmatprep.subr.mxu0 0.0
        %1498 = vmatpush2.msra.mxu0 0.0
        %1499 = vmatprep.subr.mxu0 0.0
        %1500 = vmatpush2.msra.mxu0 0.0
        %1501 = vmatprep.subr.mxu0 0.0
        %1502 = vmatpush2.msra.mxu0 0.0
        %1503 = vmatprep.subr.mxu0 0.0
        %1504 = vmatpush2.msra.mxu0 0.0
        %1505 = vmatprep.subr.mxu0 0.0
        %1506 = vmatpush2.msra.mxu0 0.0
        %1507 = vmatprep.subr.mxu0 0.0
        %1508 = vmatpush2.msra.mxu0 0.0
        %1509 = vmatprep.subr.mxu0 0.0
        %1510 = vmatpush2.msra.mxu0 0.0
        %1511 = vmatprep.subr.mxu0 0.0
        %1512 = vmatpush2.msra.mxu0 0.0
        %1513 = vmatprep.subr.mxu0 0.0
        %1514 = vmatpush2.msra.mxu0 0.0
        %1515 = vmatprep.subr.mxu0 0.0
        %1516 = vmatpush2.msra.mxu0 0.0
        %1517 = vmatprep.subr.mxu0 0.0
        %1518 = vmatpush2.msra.mxu0 0.0
        %1519 = vmatprep.subr.mxu0 0.0
        %1520 = vmatpush2.msra.mxu0 0.0
        %1521 = vmatprep.subr.mxu0 0.0
        %1522 = vmatpush2.msra.mxu0 0.0
        %1523 = vmatprep.subr.mxu0 0.0
        %1524 = vmatpush2.msra.mxu0 0.0
        %1525 = vmatprep.mubr.f32.mxu0 0.0
        %1526 = vmatmul.mubr.f32.gmra.mxu0 %v1437
        %v1527 = vpop.f32.mrf.mxu0
        %v1528 = vadd.f32 %v1459, %v1527
        %v1529 = vpop.f32.mrf.mxu0
        %1530 = vdwg.mxu0
        %v1531 = vadd.f32 %v1316, %v1528
        %1532 = vst.msk [vmem:[%s431] sm:$0xff] %vm439, %v1531
        %s1533 = sand.u32 %s313, 1
        %s1534 = scalar_lea.sflag [#allocation4], %s1533
        %s1535 = sand.u32 %s313, 1
        %s1536 = smul.addr %s1535, 8
        %s1537 = scalar_lea.vmem [#allocation3], %s1536
        // Predicated region
        $region73: #{tpu_custom_call.1} parent=71 // pred_check
          %p1538 = pneg %p323
        $region74: #{tpu_custom_call.1} parent=71 // pred_check_branch
          %1540 = sbr.rel (%p1538) target = $region76
        $region75: #{tpu_custom_call.1} parent=71 // pred_region
          %s1542 = ssub.s32 128, 128
          %1543 = vsyncadd %s1534, %s1542
          %s1544 = smul.addr %s27, 128
          %s1545 = scalar_lea.hbm %s13, %s1544
          %s1547 = sshll.u32 %s1537, 4
          %s1548 = int_to_ptr.vmem [resolvable:$true] %s1547
          %1550 = dma.vmem_to_hbm [thread:$0]  %s1548, 128, %s1545, %s1534
        $region76: #{tpu_custom_call.1} parent=71 // pred_fallthru
          _
      $region72: #{tpu_custom_call.1} parent=5 // pred_fallthru
        _
      %p1551 = scmp.le.s32.totalorder 2, %s22
      // Predicated region
      $region77: #{tpu_custom_call.1} parent=5 // pred_check
        %p1552 = pneg %p1551
      $region78: #{tpu_custom_call.1} parent=5 // pred_check_branch
        %1554 = sbr.rel (%p1552) target = $region80
      $region79: #{tpu_custom_call.1} parent=5 // pred_region
        %s1555 = ssub.s32 %s22, 2
        // Predicated region
        $region81: #{tpu_custom_call.1} parent=79 // pred_check
          %p1556 = pneg %p329
        $region82: #{tpu_custom_call.1} parent=79 // pred_check_branch
          %1558 = sbr.rel (%p1556) target = $region84
        $region83: #{tpu_custom_call.1} parent=79 // pred_region
          %s1559 = sand.u32 %s314, 1
          %s1560 = scalar_lea.sflag [#allocation4], %s1559
          %s1561 = sand.u32 %s314, 1
          %s1562 = smul.addr %s1561, 8
          %s1563 = scalar_lea.vmem [#allocation3], %s1562
          %1564 = dma.done %s1560, 128
        $region84: #{tpu_custom_call.1} parent=79 // pred_fallthru
          _
      $region80: #{tpu_custom_call.1} parent=5 // pred_fallthru
        _
    $region6: #{tpu_custom_call.1} parent=1 // loop_footer
      %s26 = sadd.s32 1, %s22
    $region7: #{tpu_custom_call.1} parent=1 // loop_footer_branch
      %21 = sbr.rel target = $region3
    $region8: #{tpu_custom_call.1} parent=1 // loop_exit
      _
    %1565 = vsyncpa [#allocation4], 1
    %s1566 = scalar_lea.sflag [#allocation4], 1
    %1567 = vsyncpa %s1566, 1

</llo_original>
